<compile_context>
chip_gen: v7x
topology: tpu7x:2x2x1
jax: 0.10.0
libtpu: 0.0.40
codegen_flags: <defaults>
</compile_context>

<pallas_src>
import jax
import jax.numpy as jnp
from jax import lax
from jax.experimental import pallas as pl
from jax.experimental.pallas import tpu as pltpu

EMB_WORD = 200   # nn.Embedding output dim / c1 input channels
C1_OUT = 512     # c1 output channels / c2 input channels
K = 3            # conv kernel width
PAD = 1          # conv padding


def _make_kernel(l_pad, l_valid):
    """Kernel for one (BB*l_pad, .) row slab; l_pad / l_valid are static."""
    needs_tail_mask = l_valid < l_pad

    def kernel(x_ref, w1_ref, b1_ref, w2_ref, b2_ref, mask_ref, o_ref):
        m = x_ref.shape[0]
        not_first = mask_ref[0]   # (m,1) f32, 0.0 on the first row of each sequence
        not_last = mask_ref[1]    # (m,1) f32, 0.0 on the last row of each sequence

        def conv_relu(a, w_ref, b_ref):
            # Conv1d(kernel=3, padding=1) + bias + ReLU on a flat row slab.
            # Three aligned matmuls (one per tap); the +/-1 shifts are sublane
            # rolls of the f32 tap outputs, masked at sequence boundaries to
            # reproduce the conv zero padding.
            z_prev = jnp.dot(a, w_ref[0], preferred_element_type=jnp.float32)
            z_mid = jnp.dot(a, w_ref[1], preferred_element_type=jnp.float32)
            z_next = jnp.dot(a, w_ref[2], preferred_element_type=jnp.float32)
            acc = z_mid + b_ref[...]                              # bias added once
            acc = acc + pltpu.roll(z_prev, 1, 0) * not_first      # x[i-1] @ w[0]
            acc = acc + pltpu.roll(z_next, m - 1, 0) * not_last   # x[i+1] @ w[2]
            return jnp.maximum(acc, 0.0)                          # ReLU (VPU)

        a1 = conv_relu(x_ref[...], w1_ref, b1_ref)                # (m, 512) f32
        if needs_tail_mask:
            a1 = a1 * mask_ref[2]   # zero rows that only pad L up to l_pad
        o_ref[...] = conv_relu(a1.astype(jnp.bfloat16), w2_ref, b2_ref)

    return kernel


def davenet_text_forward(tokens, params, *, block_rows=256):
    """Mirrors DavenetText.forward: (B, L) int tokens -> (B, E, 1, L) f32."""
    w1, b1 = params["w1"], params["b1"]
    w2, b2 = params["w2"], params["b2"]
    E = w2.shape[2]
    B, L = tokens.shape

    # Embedding lookup (data-dependent gather) stays in plain JAX glue.
    emb = jnp.take(params["emb"], tokens, axis=0)                 # (B, L, 200) f32

    # Pad L to a sublane multiple; pick a batch block so the matmul M-dim
    # approaches `block_rows`, keeping >=2 grid steps when possible so the
    # "parallel" axis can feed both v7x TensorCores.
    l_pad = max(8, -(-L // 8) * 8)
    bb = max(1, block_rows // l_pad)
    if B >= 2:
        bb = min(bb, max(1, B // 2))
    bb = min(bb, B)
    b_pad = -(-B // bb) * bb
    grid = b_pad // bb
    m_blk = bb * l_pad

    emb = jnp.pad(emb, ((0, b_pad - B), (0, l_pad - L), (0, 0)))
    x_flat = emb.astype(jnp.bfloat16).reshape(b_pad * l_pad, EMB_WORD)

    w1b = w1.astype(jnp.bfloat16)
    w2b = w2.astype(jnp.bfloat16)
    b1f = b1.astype(jnp.float32)
    b2f = b2.astype(jnp.float32)

    # 0/1 boundary masks, identical for every grid step (constant index_map).
    pos = jnp.tile(jnp.arange(l_pad, dtype=jnp.int32), bb)        # (m_blk,)
    masks = jnp.stack([(pos != 0), (pos != l_pad - 1), (pos < L)],
                      axis=0).astype(jnp.float32)[:, :, None]     # (3, m_blk, 1)

    def const_spec(shape):
        return pl.BlockSpec(shape, lambda i, _n=len(shape): (0,) * _n)

    in_specs = [
        pl.BlockSpec((m_blk, EMB_WORD), lambda i: (i, 0)),
        const_spec(w1b.shape), const_spec(b1f.shape),
        const_spec(w2b.shape), const_spec(b2f.shape),
        const_spec(masks.shape),
    ]
    out_specs = pl.BlockSpec((m_blk, E), lambda i: (i, 0))
    out_shape = jax.ShapeDtypeStruct((b_pad * l_pad, E), jnp.float32)

    total_rows = b_pad * l_pad
    flops = 2 * K * total_rows * (EMB_WORD * C1_OUT + C1_OUT * E)
    bytes_accessed = int(x_flat.size * 2 + (w1b.size + w2b.size) * 2
                         + (b1f.size + b2f.size + masks.size) * 4
                         + total_rows * E * 4)

    # VMEM: double-buffered weights/bias/masks + in/out blocks, plus headroom
    # for the live f32 tap outputs inside the body.
    resident = ((w1b.size + w2b.size) * 2 + (b1f.size + b2f.size) * 4
                + masks.size * 4 + m_blk * (EMB_WORD * 2 + E * 4))
    live = m_blk * (4 * C1_OUT * 4 + C1_OUT * 2 + 4 * E * 4)
    vmem_limit = int(min(64 << 20, max(16 << 20, 2 * resident + live + (2 << 20))))

    out_flat = pl.pallas_call(
        _make_kernel(l_pad, L),
        out_shape=out_shape,
        grid_spec=pltpu.PrefetchScalarGridSpec(
            num_scalar_prefetch=0,
            grid=(grid,),
            in_specs=in_specs,
            out_specs=out_specs),
        compiler_params=pltpu.CompilerParams(
            dimension_semantics=("parallel",),
            vmem_limit_bytes=vmem_limit),
        cost_estimate=pl.CostEstimate(
            flops=flops, transcendentals=0, bytes_accessed=bytes_accessed),
    )(x_flat, w1b, b1f, w2b, b2f, masks)

    out = out_flat.reshape(b_pad, l_pad, E)[:B, :L]               # (B, L, E)
    # (B, L, E) -> (B, E, L) -> unsqueeze(2) -> (B, E, 1, L), as in PyTorch.
    # (In-kernel transposed store only pays off when L % 128 == 0.)
    return jnp.transpose(out, (0, 2, 1))[:, :, None, :]


# --------------------------- parameter init (deterministic) ------------------
def init_params(key, embedding_dim, vocab_size, padding_idx=0):
    ks = jax.random.split(key, 5)

    def conv_w(k, cin, cout):
        # kernel layout (K, Cin, Cout); PyTorch layout would be (Cout, Cin, K).
        return 0.05 * jax.random.normal(k, (K, cin, cout), jnp.float32)

    def conv_b(k, cout):
        return 0.05 * jax.random.normal(k, (1, cout), jnp.float32)

    emb = 0.05 * jax.random.normal(ks[0], (vocab_size, EMB_WORD), jnp.float32)
    emb = emb.at[padding_idx].set(0.0)   # nn.Embedding(padding_idx=0): zero row

    return {
        "emb": emb,
        "w1": conv_w(ks[1], EMB_WORD, C1_OUT),      "b1": conv_b(ks[2], C1_OUT),
        "w2": conv_w(ks[3], C1_OUT, embedding_dim), "b2": conv_b(ks[4], embedding_dim),
    }


# --------------------------- pure-JAX reference -------------------------------
def reference_forward(tokens, params):
    # Same forward in plain JAX/XLA.  To isolate kernel error we apply the same
    # bf16 rounding of weights/activations the kernel uses (accumulation f32).
    q = lambda a: a.astype(jnp.bfloat16).astype(jnp.float32)
    emb = q(jnp.take(params["emb"], tokens, axis=0))          # (B, L, 200)
    x = jnp.transpose(emb, (0, 2, 1))                         # NCL, like PyTorch

    def conv(x, w, b):
        w_oik = jnp.transpose(q(w), (2, 1, 0))                # (Cout, Cin, K)
        y = lax.conv_general_dilated(x, w_oik, (1,), [(PAD, PAD)],
                                     dimension_numbers=("NCH", "OIH", "NCH"))
        return y + b.reshape(1, -1, 1)

    x = jax.nn.relu(conv(x, params["w1"], params["b1"]))
    x = q(x)   # kernel feeds bf16 activations into the second conv
    x = jax.nn.relu(conv(x, params["w2"], params["b2"]))
    return x[:, :, None, :]                                   # (B, E, 1, L)


if __name__ == "__main__":
    B, L = 2, 8
    vocab_size = 50
    embedding_dim = 128

    key = jax.random.PRNGKey(0)
    k_tok, k_par = jax.random.split(key)
    params = init_params(k_par, embedding_dim, vocab_size, padding_idx=0)
    tokens = jax.random.randint(k_tok, (B, L), 0, vocab_size, dtype=jnp.int32)

    x_out = jax.block_until_ready(davenet_text_forward(tokens, params))
    x_ref = reference_forward(tokens, params)

    assert x_out.shape == (B, embedding_dim, 1, L), x_out.shape
    max_err = float(jnp.max(jnp.abs(x_out - x_ref)))
    assert jnp.allclose(x_out, x_ref, rtol=1e-3, atol=1e-3), max_err

    print("KERNEL_OK")
</pallas_src>

<mosaic_0001>
module attributes {stable_mosaic.version = 11 : i64} {
  func.func @kernel(%arg0: i32, %arg1: memref<8x200xbf16, #tpu.memory_space<vmem>>, %arg2: memref<3x200x512xbf16, #tpu.memory_space<vmem>>, %arg3: memref<1x512xf32, #tpu.memory_space<vmem>>, %arg4: memref<3x512x128xbf16, #tpu.memory_space<vmem>>, %arg5: memref<1x128xf32, #tpu.memory_space<vmem>>, %arg6: memref<3x8x1xf32, #tpu.memory_space<vmem>>, %arg7: memref<8x128xf32, #tpu.memory_space<vmem>>) attributes {dimension_semantics = [#tpu.dimension_semantics<parallel>], iteration_bounds = array<i64: 2>, scalar_prefetch = 0 : i64, scratch_operands = 0 : i64, tpu.core_type = #tpu.core_type<tc>, window_params = [{transform_indices = @transform_0, window_bounds = array<i64: 8, 200>}, {pipeline_mode = #tpu.pipeline_mode<synchronous>, transform_indices = @transform_1, window_bounds = array<i64: 3, 200, 512>}, {pipeline_mode = #tpu.pipeline_mode<synchronous>, transform_indices = @transform_2, window_bounds = array<i64: 1, 512>}, {pipeline_mode = #tpu.pipeline_mode<synchronous>, transform_indices = @transform_3, window_bounds = array<i64: 3, 512, 128>}, {pipeline_mode = #tpu.pipeline_mode<synchronous>, transform_indices = @transform_4, window_bounds = array<i64: 1, 128>}, {pipeline_mode = #tpu.pipeline_mode<synchronous>, transform_indices = @transform_5, window_bounds = array<i64: 3, 8, 1>}, {transform_indices = @transform_6, window_bounds = array<i64: 8, 128>}]} {
    %c0 = arith.constant 0 : index
    %c0_0 = arith.constant 0 : index
    %c0_1 = arith.constant 0 : index
    %0 = vector.load %arg6[%c0, %c0_0, %c0_1] : memref<3x8x1xf32, #tpu.memory_space<vmem>>, vector<1x8x1xf32>
    %1 = vector.shape_cast %0 : vector<1x8x1xf32> to vector<8x1xf32>
    %c1 = arith.constant 1 : index
    %c0_2 = arith.constant 0 : index
    %c0_3 = arith.constant 0 : index
    %2 = vector.load %arg6[%c1, %c0_2, %c0_3] : memref<3x8x1xf32, #tpu.memory_space<vmem>>, vector<1x8x1xf32>
    %3 = vector.shape_cast %2 : vector<1x8x1xf32> to vector<8x1xf32>
    %c0_4 = arith.constant 0 : index
    %c0_5 = arith.constant 0 : index
    %4 = vector.load %arg1[%c0_4, %c0_5] : memref<8x200xbf16, #tpu.memory_space<vmem>>, vector<8x200xbf16>
    %c0_6 = arith.constant 0 : index
    %c0_7 = arith.constant 0 : index
    %c0_8 = arith.constant 0 : index
    %5 = vector.load %arg2[%c0_6, %c0_7, %c0_8] : memref<3x200x512xbf16, #tpu.memory_space<vmem>>, vector<1x200x512xbf16>
    %6 = vector.shape_cast %5 : vector<1x200x512xbf16> to vector<200x512xbf16>
    %cst = arith.constant dense<0.000000e+00> : vector<8x512xf32>
    %7 = tpu.matmul %4, %6, %cst {dimension_numbers = #tpu.dot_dimension_numbers<[1], [0], [0], [1], [0, 0, 1, 1], [], []>} : vector<8x200xbf16>, vector<200x512xbf16>, vector<8x512xf32> -> vector<8x512xf32>
    %c1_9 = arith.constant 1 : index
    %c0_10 = arith.constant 0 : index
    %c0_11 = arith.constant 0 : index
    %8 = vector.load %arg2[%c1_9, %c0_10, %c0_11] : memref<3x200x512xbf16, #tpu.memory_space<vmem>>, vector<1x200x512xbf16>
    %9 = vector.shape_cast %8 : vector<1x200x512xbf16> to vector<200x512xbf16>
    %cst_12 = arith.constant dense<0.000000e+00> : vector<8x512xf32>
    %10 = tpu.matmul %4, %9, %cst_12 {dimension_numbers = #tpu.dot_dimension_numbers<[1], [0], [0], [1], [0, 0, 1, 1], [], []>} : vector<8x200xbf16>, vector<200x512xbf16>, vector<8x512xf32> -> vector<8x512xf32>
    %c2 = arith.constant 2 : index
    %c0_13 = arith.constant 0 : index
    %c0_14 = arith.constant 0 : index
    %11 = vector.load %arg2[%c2, %c0_13, %c0_14] : memref<3x200x512xbf16, #tpu.memory_space<vmem>>, vector<1x200x512xbf16>
    %12 = vector.shape_cast %11 : vector<1x200x512xbf16> to vector<200x512xbf16>
    %cst_15 = arith.constant dense<0.000000e+00> : vector<8x512xf32>
    %13 = tpu.matmul %4, %12, %cst_15 {dimension_numbers = #tpu.dot_dimension_numbers<[1], [0], [0], [1], [0, 0, 1, 1], [], []>} : vector<8x200xbf16>, vector<200x512xbf16>, vector<8x512xf32> -> vector<8x512xf32>
    %c0_16 = arith.constant 0 : index
    %c0_17 = arith.constant 0 : index
    %14 = vector.load %arg3[%c0_16, %c0_17] : memref<1x512xf32, #tpu.memory_space<vmem>>, vector<1x512xf32>
    %15 = vector.broadcast %14 : vector<1x512xf32> to vector<8x512xf32>
    %16 = arith.addf %10, %15 : vector<8x512xf32>
    %c1_i32 = arith.constant 1 : i32
    %17 = tpu.dynamic_rotate %7 by %c1_i32 dim 0 : vector<8x512xf32>, i32 -> vector<8x512xf32>
    %18 = vector.broadcast %1 : vector<8x1xf32> to vector<8x512xf32>
    %19 = arith.mulf %17, %18 : vector<8x512xf32>
    %20 = arith.addf %16, %19 : vector<8x512xf32>
    %c7_i32 = arith.constant 7 : i32
    %21 = tpu.dynamic_rotate %13 by %c7_i32 dim 0 : vector<8x512xf32>, i32 -> vector<8x512xf32>
    %22 = vector.broadcast %3 : vector<8x1xf32> to vector<8x512xf32>
    %23 = arith.mulf %21, %22 : vector<8x512xf32>
    %24 = arith.addf %20, %23 : vector<8x512xf32>
    %cst_18 = arith.constant 0.000000e+00 : f32
    %25 = vector.broadcast %cst_18 : f32 to vector<8x512xf32>
    %26 = arith.maximumf %24, %25 : vector<8x512xf32>
    %27 = arith.truncf %26 : vector<8x512xf32> to vector<8x512xbf16>
    %c0_19 = arith.constant 0 : index
    %c0_20 = arith.constant 0 : index
    %c0_21 = arith.constant 0 : index
    %28 = vector.load %arg4[%c0_19, %c0_20, %c0_21] : memref<3x512x128xbf16, #tpu.memory_space<vmem>>, vector<1x512x128xbf16>
    %29 = vector.shape_cast %28 : vector<1x512x128xbf16> to vector<512x128xbf16>
    %cst_22 = arith.constant dense<0.000000e+00> : vector<8x128xf32>
    %30 = tpu.matmul %27, %29, %cst_22 {dimension_numbers = #tpu.dot_dimension_numbers<[1], [0], [0], [1], [0, 0, 1, 1], [], []>} : vector<8x512xbf16>, vector<512x128xbf16>, vector<8x128xf32> -> vector<8x128xf32>
    %c1_23 = arith.constant 1 : index
    %c0_24 = arith.constant 0 : index
    %c0_25 = arith.constant 0 : index
    %31 = vector.load %arg4[%c1_23, %c0_24, %c0_25] : memref<3x512x128xbf16, #tpu.memory_space<vmem>>, vector<1x512x128xbf16>
    %32 = vector.shape_cast %31 : vector<1x512x128xbf16> to vector<512x128xbf16>
    %cst_26 = arith.constant dense<0.000000e+00> : vector<8x128xf32>
    %33 = tpu.matmul %27, %32, %cst_26 {dimension_numbers = #tpu.dot_dimension_numbers<[1], [0], [0], [1], [0, 0, 1, 1], [], []>} : vector<8x512xbf16>, vector<512x128xbf16>, vector<8x128xf32> -> vector<8x128xf32>
    %c2_27 = arith.constant 2 : index
    %c0_28 = arith.constant 0 : index
    %c0_29 = arith.constant 0 : index
    %34 = vector.load %arg4[%c2_27, %c0_28, %c0_29] : memref<3x512x128xbf16, #tpu.memory_space<vmem>>, vector<1x512x128xbf16>
    %35 = vector.shape_cast %34 : vector<1x512x128xbf16> to vector<512x128xbf16>
    %cst_30 = arith.constant dense<0.000000e+00> : vector<8x128xf32>
    %36 = tpu.matmul %27, %35, %cst_30 {dimension_numbers = #tpu.dot_dimension_numbers<[1], [0], [0], [1], [0, 0, 1, 1], [], []>} : vector<8x512xbf16>, vector<512x128xbf16>, vector<8x128xf32> -> vector<8x128xf32>
    %c0_31 = arith.constant 0 : index
    %c0_32 = arith.constant 0 : index
    %37 = vector.load %arg5[%c0_31, %c0_32] : memref<1x128xf32, #tpu.memory_space<vmem>>, vector<1x128xf32>
    %38 = vector.broadcast %37 : vector<1x128xf32> to vector<8x128xf32>
    %39 = arith.addf %33, %38 : vector<8x128xf32>
    %c1_i32_33 = arith.constant 1 : i32
    %40 = tpu.dynamic_rotate %30 by %c1_i32_33 dim 0 : vector<8x128xf32>, i32 -> vector<8x128xf32>
    %41 = vector.broadcast %1 : vector<8x1xf32> to vector<8x128xf32>
    %42 = arith.mulf %40, %41 : vector<8x128xf32>
    %43 = arith.addf %39, %42 : vector<8x128xf32>
    %c7_i32_34 = arith.constant 7 : i32
    %44 = tpu.dynamic_rotate %36 by %c7_i32_34 dim 0 : vector<8x128xf32>, i32 -> vector<8x128xf32>
    %45 = vector.broadcast %3 : vector<8x1xf32> to vector<8x128xf32>
    %46 = arith.mulf %44, %45 : vector<8x128xf32>
    %47 = arith.addf %43, %46 : vector<8x128xf32>
    %cst_35 = arith.constant 0.000000e+00 : f32
    %48 = vector.broadcast %cst_35 : f32 to vector<8x128xf32>
    %49 = arith.maximumf %47, %48 : vector<8x128xf32>
    %c0_36 = arith.constant 0 : index
    %c0_37 = arith.constant 0 : index
    %50 = vector.load %arg7[%c0_36, %c0_37] : memref<8x128xf32, #tpu.memory_space<vmem>>, vector<8x128xf32>
    tpu.vector_store %arg7[%c0_36, %c0_37], %49 {strides = array<i32>} : memref<8x128xf32, #tpu.memory_space<vmem>>, vector<8x128xf32>,
    return
  }
  func.func @transform_0(%arg0: i32) -> (i32, i32) {
    %c0_i32 = arith.constant 0 : i32
    %c0_i32_0 = arith.constant 0 : i32
    return %arg0, %c0_i32 : i32, i32
  }
  func.func @transform_1(%arg0: i32) -> (i32, i32, i32) {
    %c0_i32 = arith.constant 0 : i32
    %c0_i32_0 = arith.constant 0 : i32
    %c0_i32_1 = arith.constant 0 : i32
    %c0_i32_2 = arith.constant 0 : i32
    return %c0_i32, %c0_i32_0, %c0_i32_1 : i32, i32, i32
  }
  func.func @transform_2(%arg0: i32) -> (i32, i32) {
    %c0_i32 = arith.constant 0 : i32
    %c0_i32_0 = arith.constant 0 : i32
    %c0_i32_1 = arith.constant 0 : i32
    return %c0_i32, %c0_i32_0 : i32, i32
  }
  func.func @transform_3(%arg0: i32) -> (i32, i32, i32) {
    %c0_i32 = arith.constant 0 : i32
    %c0_i32_0 = arith.constant 0 : i32
    %c0_i32_1 = arith.constant 0 : i32
    %c0_i32_2 = arith.constant 0 : i32
    return %c0_i32, %c0_i32_0, %c0_i32_1 : i32, i32, i32
  }
  func.func @transform_4(%arg0: i32) -> (i32, i32) {
    %c0_i32 = arith.constant 0 : i32
    %c0_i32_0 = arith.constant 0 : i32
    %c0_i32_1 = arith.constant 0 : i32
    return %c0_i32, %c0_i32_0 : i32, i32
  }
  func.func @transform_5(%arg0: i32) -> (i32, i32, i32) {
    %c0_i32 = arith.constant 0 : i32
    %c0_i32_0 = arith.constant 0 : i32
    %c0_i32_1 = arith.constant 0 : i32
    %c0_i32_2 = arith.constant 0 : i32
    return %c0_i32, %c0_i32_0, %c0_i32_1 : i32, i32, i32
  }
  func.func @transform_6(%arg0: i32) -> (i32, i32) {
    %c0_i32 = arith.constant 0 : i32
    %c0_i32_0 = arith.constant 0 : i32
    return %arg0, %c0_i32 : i32, i32
  }
}

</mosaic_0001>

<llo_original>
// kernel: tpu_custom_call.1
$region0: #{tpu_custom_call.1}
  #allocation0 [shape = 'u32[]', space=smem, size = 0x4, offset = 0x4, fixed_abs, tag = 'smem constant byte address 0x4 - core index']
  #allocation1 [shape = 'u32[144,128]{1,0:T(1,128)}', space=vmem, size = 0x12000, scoped, tag = 'internal scratch']
  %s0 = inlined_call_operand.vmem [shape: bf16[16,200], index: 0, kind: input, shape index: {}]
  %s1 = inlined_call_operand.hbm [shape: bf16[3,200,512], index: 1, kind: input, shape index: {}]
  %s2 = inlined_call_operand.vmem [shape: f32[1,512], index: 2, kind: input, shape index: {}]
  %s3 = inlined_call_operand.hbm [shape: bf16[3,512,128], index: 3, kind: input, shape index: {}]
  %s4 = inlined_call_operand.vmem [shape: f32[1,128], index: 4, kind: input, shape index: {}]
  %s5 = inlined_call_operand.vmem [shape: f32[3,8,1], index: 5, kind: input, shape index: {}]
  %s6 = inlined_call_operand.hbm [shape: f32[16,128], index: 6, kind: output, shape index: {}]
  %s7 = sld [smem:[#allocation0]]
  $region65: #{tpu_custom_call.1} parent=0
    _
  %s9 = ssub.s32 1, %s7
  %s10 = scalar_select 0, %s9, %s7
  $region1: #{tpu_custom_call.1} parent=0
    #allocation2 [shape = 'u8[614400]{0}', space=vmem, size = 0x96000, scoped, tag = 'input window, operand 1, single buffered']
    #allocation3 [shape = 's32[2]{0}', space=sflag, size = 0x8, scoped, tag = 'scoped memory for tpu_custom_call.1']
    #allocation4 [shape = 's32[2]{0}', space=sflag, size = 0x8, scoped, tag = 'scoped memory for tpu_custom_call.1']
    #allocation5 [shape = 'u8[393216]{0}', space=vmem, size = 0x60000, scoped, tag = 'input window, operand 3, single buffered']
    #allocation6 [shape = 's32[1]{0}', space=sflag, size = 0x4, scoped, tag = 'scoped memory for tpu_custom_call.1']
    #allocation7 [shape = 'u8[8192]{0}', space=vmem, size = 0x2000, scoped, tag = 'output window, operand 0']
    %11 = vsyncpa [#allocation3], 0
    %12 = vsyncpa [#allocation6], 0
    %13 = vsyncpa [#allocation4], 0
    %s14 = scalar_lea.sflag [#allocation4], 1
    %15 = vsyncpa %s14, 0
    loop: start=0, step=1, limit=4
    $region2: #{tpu_custom_call.1} parent=1 // loop_pre_header
      _
    $region3: #{tpu_custom_call.1} parent=1 // loop_header
      %s17 = sphi 0, %s21
      %p18 = scmp.ge.s32.totalorder %s17, 4
      %s27 = sphi 0, %s29
      %s30 = sphi 0, %s27
      %s31 = sphi 0, %s30
      %s47 = sphi 0, %s31
      %s51 = sphi 0, %s51
      %s53 = sphi 0, %s51
      %s54 = sphi 0, %s53
      %s68 = sphi 0, %s54
      %s72 = sphi 0, %s72
      %s74 = sphi 0, %s72
      %s75 = sphi 0, %s74
      %s89 = sphi 0, %s75
      %s93 = sphi 0, %s93
      %s95 = sphi 0, %s93
      %s96 = sphi 0, %s95
      %s110 = sphi 0, %s96
      %s114 = sphi 0, %s114
      %s116 = sphi 0, %s114
      %s117 = sphi 0, %s116
      %s131 = sphi 0, %s117
      %s135 = sphi 0, %s135
      %s137 = sphi 0, %s135
      %s138 = sphi 0, %s137
      %s152 = sphi 0, %s138
      %s158 = sphi 0, %s160
      %s161 = sphi 0, %s158
      %s162 = sphi 0, %s161
      %s178 = sphi 0, %s162
    $region4: #{tpu_custom_call.1} parent=1 // loop_header_branch
      %20 = sbr.rel (%p18) target = $region8
    $region5: #{tpu_custom_call.1} parent=1 // loop_body
      %s22 = ssub.s32 %s17, 1
      %s23 = ssub.s32 %s17, 2
      %s24 = sadd.s32 %s17, 1
      %s25 = ssub.s32 %s17, %s24
      %p26 = scmp.eq.s32.totalorder %s25, 0
      %s28 = sadd.s32 %s27, 1
      %s29 = scalar_select %p26, %s27, %s28
      %p32 = pneg %p26
      %p33 = scmp.eq.s32.totalorder %s17, 1
      %p34 = por %p32, %p33
      %p35 = scmp.ne.s32.totalorder %s27, %s30
      %p36 = scmp.eq.s32.totalorder %s17, 0
      %p37 = por %p35, %p36
      %p38 = scmp.ne.s32.totalorder %s27, %s30
      %p39 = scmp.eq.s32.totalorder %s22, 1
      %p40 = por %p38, %p39
      %p41 = scmp.ne.s32.totalorder %s30, %s31
      %p42 = scmp.eq.s32.totalorder %s22, 0
      %p43 = por %p41, %p42
      %p44 = scmp.ne.s32.totalorder %s30, %s31
      %p45 = scmp.eq.s32.totalorder %s23, 1
      %p46 = por %p44, %p45
      %p48 = scmp.ne.s32.totalorder %s31, %s47
      %p49 = scmp.eq.s32.totalorder %s23, 0
      %p50 = por %p48, %p49
      %s52 = sadd.s32 %s51, 1
      %p55 = scmp.eq.s32.totalorder %s17, 1
      %p56 = scmp.ne.s32.totalorder %s51, %s53
      %p57 = scmp.eq.s32.totalorder %s17, 0
      %p58 = por %p56, %p57
      %p59 = scmp.ne.s32.totalorder %s51, %s53
      %p60 = scmp.eq.s32.totalorder %s22, 1
      %p61 = por %p59, %p60
      %p62 = scmp.ne.s32.totalorder %s53, %s54
      %p63 = scmp.eq.s32.totalorder %s22, 0
      %p64 = por %p62, %p63
      %p65 = scmp.ne.s32.totalorder %s53, %s54
      %p66 = scmp.eq.s32.totalorder %s23, 1
      %p67 = por %p65, %p66
      %p69 = scmp.ne.s32.totalorder %s54, %s68
      %p70 = scmp.eq.s32.totalorder %s23, 0
      %p71 = por %p69, %p70
      %s73 = sadd.s32 %s72, 1
      %p76 = scmp.eq.s32.totalorder %s17, 1
      %p77 = scmp.ne.s32.totalorder %s72, %s74
      %p78 = scmp.eq.s32.totalorder %s17, 0
      %p79 = por %p77, %p78
      %p80 = scmp.ne.s32.totalorder %s72, %s74
      %p81 = scmp.eq.s32.totalorder %s22, 1
      %p82 = por %p80, %p81
      %p83 = scmp.ne.s32.totalorder %s74, %s75
      %p84 = scmp.eq.s32.totalorder %s22, 0
      %p85 = por %p83, %p84
      %p86 = scmp.ne.s32.totalorder %s74, %s75
      %p87 = scmp.eq.s32.totalorder %s23, 1
      %p88 = por %p86, %p87
      %p90 = scmp.ne.s32.totalorder %s75, %s89
      %p91 = scmp.eq.s32.totalorder %s23, 0
      %p92 = por %p90, %p91
      %s94 = sadd.s32 %s93, 1
      %p97 = scmp.eq.s32.totalorder %s17, 1
      %p98 = scmp.ne.s32.totalorder %s93, %s95
      %p99 = scmp.eq.s32.totalorder %s17, 0
      %p100 = por %p98, %p99
      %p101 = scmp.ne.s32.totalorder %s93, %s95
      %p102 = scmp.eq.s32.totalorder %s22, 1
      %p103 = por %p101, %p102
      %p104 = scmp.ne.s32.totalorder %s95, %s96
      %p105 = scmp.eq.s32.totalorder %s22, 0
      %p106 = por %p104, %p105
      %p107 = scmp.ne.s32.totalorder %s95, %s96
      %p108 = scmp.eq.s32.totalorder %s23, 1
      %p109 = por %p107, %p108
      %p111 = scmp.ne.s32.totalorder %s96, %s110
      %p112 = scmp.eq.s32.totalorder %s23, 0
      %p113 = por %p111, %p112
      %s115 = sadd.s32 %s114, 1
      %p118 = scmp.eq.s32.totalorder %s17, 1
      %p119 = scmp.ne.s32.totalorder %s114, %s116
      %p120 = scmp.eq.s32.totalorder %s17, 0
      %p121 = por %p119, %p120
      %p122 = scmp.ne.s32.totalorder %s114, %s116
      %p123 = scmp.eq.s32.totalorder %s22, 1
      %p124 = por %p122, %p123
      %p125 = scmp.ne.s32.totalorder %s116, %s117
      %p126 = scmp.eq.s32.totalorder %s22, 0
      %p127 = por %p125, %p126
      %p128 = scmp.ne.s32.totalorder %s116, %s117
      %p129 = scmp.eq.s32.totalorder %s23, 1
      %p130 = por %p128, %p129
      %p132 = scmp.ne.s32.totalorder %s117, %s131
      %p133 = scmp.eq.s32.totalorder %s23, 0
      %p134 = por %p132, %p133
      %s136 = sadd.s32 %s135, 1
      %p139 = scmp.eq.s32.totalorder %s17, 1
      %p140 = scmp.ne.s32.totalorder %s135, %s137
      %p141 = scmp.eq.s32.totalorder %s17, 0
      %p142 = por %p140, %p141
      %p143 = scmp.ne.s32.totalorder %s135, %s137
      %p144 = scmp.eq.s32.totalorder %s22, 1
      %p145 = por %p143, %p144
      %p146 = scmp.ne.s32.totalorder %s137, %s138
      %p147 = scmp.eq.s32.totalorder %s22, 0
      %p148 = por %p146, %p147
      %p149 = scmp.ne.s32.totalorder %s137, %s138
      %p150 = scmp.eq.s32.totalorder %s23, 1
      %p151 = por %p149, %p150
      %p153 = scmp.ne.s32.totalorder %s138, %s152
      %p154 = scmp.eq.s32.totalorder %s23, 0
      %p155 = por %p153, %p154
      %s156 = ssub.s32 %s17, %s24
      %p157 = scmp.eq.s32.totalorder %s156, 0
      %s159 = sadd.s32 %s158, 1
      %s160 = scalar_select %p157, %s158, %s159
      %p163 = pneg %p157
      %p164 = scmp.eq.s32.totalorder %s17, 1
      %p165 = por %p163, %p164
      %p166 = scmp.ne.s32.totalorder %s158, %s161
      %p167 = scmp.eq.s32.totalorder %s17, 0
      %p168 = por %p166, %p167
      %p169 = scmp.ne.s32.totalorder %s158, %s161
      %p170 = scmp.eq.s32.totalorder %s22, 1
      %p171 = por %p169, %p170
      %p172 = scmp.ne.s32.totalorder %s161, %s162
      %p173 = scmp.eq.s32.totalorder %s22, 0
      %p174 = por %p172, %p173
      %p175 = scmp.ne.s32.totalorder %s161, %s162
      %p176 = scmp.eq.s32.totalorder %s23, 1
      %p177 = por %p175, %p176
      %p179 = scmp.ne.s32.totalorder %s162, %s178
      %p180 = scmp.eq.s32.totalorder %s23, 0
      %p181 = por %p179, %p180
      %p182 = scmp.le.s32.totalorder 1, %s17
      %p183 = scmp.lt.s32.totalorder %s17, 3
      %p184 = pnand %p182, %p183
      %p185 = pneg %p184
      // Predicated region
      $region9: #{tpu_custom_call.1} parent=5 // pred_check
        _
      $region10: #{tpu_custom_call.1} parent=5 // pred_check_branch
        %187 = sbr.rel (%p184) target = $region12
      $region11: #{tpu_custom_call.1} parent=5 // pred_region
        %s188 = ssub.s32 %s17, 1
        // Predicated region
        $region13: #{tpu_custom_call.1} parent=11 // pred_check
          %p189 = pneg %p64
        $region14: #{tpu_custom_call.1} parent=11 // pred_check_branch
          %191 = sbr.rel (%p189) target = $region16
        $region15: #{tpu_custom_call.1} parent=11 // pred_region
          %s193 = ssub.s32 19200, 19200
          %194 = vsyncadd [#allocation3], %s193
          %s195 = sshll.u32 [#allocation2], 4
          %s196 = int_to_ptr.vmem [resolvable:$true] %s195
          %201 = dma.hbm_to_vmem [thread:$0]  %s1, 19200, %s196, [#allocation3], 256, 256, 16
        $region16: #{tpu_custom_call.1} parent=11 // pred_fallthru
          _
        // Predicated region
        $region17: #{tpu_custom_call.1} parent=11 // pred_check
          %p202 = pneg %p85
        $region18: #{tpu_custom_call.1} parent=11 // pred_check_branch
          %204 = sbr.rel (%p202) target = $region20
        $region19: #{tpu_custom_call.1} parent=11 // pred_region
          _
        $region20: #{tpu_custom_call.1} parent=11 // pred_fallthru
          _
        // Predicated region
        $region21: #{tpu_custom_call.1} parent=11 // pred_check
          %p205 = pneg %p106
        $region22: #{tpu_custom_call.1} parent=11 // pred_check_branch
          %207 = sbr.rel (%p205) target = $region24
        $region23: #{tpu_custom_call.1} parent=11 // pred_region
          %s209 = ssub.s32 12288, 12288
          %210 = vsyncadd [#allocation6], %s209
          %s211 = sshll.u32 [#allocation5], 4
          %s212 = int_to_ptr.vmem [resolvable:$true] %s211
          %217 = dma.hbm_to_vmem [thread:$0]  %s3, 12288, %s212, [#allocation6], 64, 64, 4
        $region24: #{tpu_custom_call.1} parent=11 // pred_fallthru
          _
        // Predicated region
        $region25: #{tpu_custom_call.1} parent=11 // pred_check
          %p218 = pneg %p127
        $region26: #{tpu_custom_call.1} parent=11 // pred_check_branch
          %220 = sbr.rel (%p218) target = $region28
        $region27: #{tpu_custom_call.1} parent=11 // pred_region
          _
        $region28: #{tpu_custom_call.1} parent=11 // pred_fallthru
          _
        // Predicated region
        $region29: #{tpu_custom_call.1} parent=11 // pred_check
          %p221 = pneg %p148
        $region30: #{tpu_custom_call.1} parent=11 // pred_check_branch
          %223 = sbr.rel (%p221) target = $region32
        $region31: #{tpu_custom_call.1} parent=11 // pred_region
          _
        $region32: #{tpu_custom_call.1} parent=11 // pred_fallthru
          _
      $region12: #{tpu_custom_call.1} parent=5 // pred_fallthru
        _
      %p224 = scmp.lt.s32.totalorder %s17, 2
      // Predicated region
      $region33: #{tpu_custom_call.1} parent=5 // pred_check
        %p225 = pneg %p224
      $region34: #{tpu_custom_call.1} parent=5 // pred_check_branch
        %227 = sbr.rel (%p225) target = $region36
      $region35: #{tpu_custom_call.1} parent=5 // pred_region
        // Predicated region
        $region37: #{tpu_custom_call.1} parent=35 // pred_check
          %p228 = pneg %p37
        $region38: #{tpu_custom_call.1} parent=35 // pred_check_branch
          %230 = sbr.rel (%p228) target = $region40
        $region39: #{tpu_custom_call.1} parent=35 // pred_region
          %p231 = scmp.lt.s32.totalorder %s17, 1
          %s232 = scalar_select %p231, %s17, 1
          %s233 = smul.addr %s232, 2
          %s234 = smul.addr %s233, 4
          %s235 = scalar_lea.vmem %s0, %s234
        $region40: #{tpu_custom_call.1} parent=35 // pred_fallthru
          _
      $region36: #{tpu_custom_call.1} parent=5 // pred_fallthru
        _
      %p236 = scmp.le.s32.totalorder 1, %s17
      %p237 = scmp.lt.s32.totalorder %s17, 3
      %p238 = pnand %p236, %p237
      %p239 = pneg %p238
      // Predicated region
      $region41: #{tpu_custom_call.1} parent=5 // pred_check
        _
      $region42: #{tpu_custom_call.1} parent=5 // pred_check_branch
        %241 = sbr.rel (%p238) target = $region44
      $region43: #{tpu_custom_call.1} parent=5 // pred_region
        %s242 = ssub.s32 %s17, 1
        // Predicated region
        $region45: #{tpu_custom_call.1} parent=43 // pred_check
          %p243 = pneg %p64
        $region46: #{tpu_custom_call.1} parent=43 // pred_check_branch
          %245 = sbr.rel (%p243) target = $region48
        $region47: #{tpu_custom_call.1} parent=43 // pred_region
          %246 = dma.done [#allocation3], 19200
        $region48: #{tpu_custom_call.1} parent=43 // pred_fallthru
          _
        // Predicated region
        $region49: #{tpu_custom_call.1} parent=43 // pred_check
          %p247 = pneg %p106
        $region50: #{tpu_custom_call.1} parent=43 // pred_check_branch
          %249 = sbr.rel (%p247) target = $region52
        $region51: #{tpu_custom_call.1} parent=43 // pred_region
          %250 = dma.done [#allocation6], 12288
        $region52: #{tpu_custom_call.1} parent=43 // pred_fallthru
          _
        %p251 = scmp.lt.s32.totalorder %s22, 1
        %s252 = scalar_select %p251, %s22, 1
        %s253 = smul.addr %s252, 2
        %s254 = smul.addr %s253, 4
        %s255 = scalar_lea.vmem %s0, %s254
        %p256 = pneg %p43
        %p257 = pneg %p40
        %p258 = pneg %p64
        %p259 = pneg %p61
        %p260 = pneg %p85
        %p261 = pneg %p82
        %p262 = pneg %p106
        %p263 = pneg %p103
        %p264 = pneg %p127
        %p265 = pneg %p124
        %p266 = pneg %p148
        %p267 = pneg %p145
        %p268 = pneg %p174
        %p269 = pneg %p171
        %s270 = sand.u32 %s161, 1
        %s271 = scalar_lea.sflag [#allocation4], %s270
        %s272 = sand.u32 %s161, 1
        %s273 = smul.addr %s272, 8
        %s274 = scalar_lea.vmem [#allocation7], %s273
        %p275 = scmp.lt.s32.totalorder %s22, 1
        %s276 = scalar_select %p275, %s22, 1
        %s277 = smul.addr %s276, 2
        %s278 = smul.addr %s277, 4
        %s279 = scalar_lea.vmem %s0, %s278
        %v281 = vld [vmem:[%s5] sm:$0xff]
        %s282 = scalar_lea.vmem %s5, 8
        %v283 = vld [vmem:[%s282] sm:$0xff]
        %v284 = vld [vmem:[%s279] sm:$0xff]
        %v285 = vld [vmem:[#allocation2] sm:$0xff]
        %v286 = vld [vmem:[#allocation2 + $0x8] sm:$0xff]
        %v287 = vld [vmem:[#allocation2 + $0x10] sm:$0xff]
        %v288 = vld [vmem:[#allocation2 + $0x18] sm:$0xff]
        %v289 = vld [vmem:[#allocation2 + $0x20] sm:$0xff]
        %v290 = vld [vmem:[#allocation2 + $0x28] sm:$0xff]
        %v291 = vld [vmem:[#allocation2 + $0x30] sm:$0xff]
        %v292 = vld [vmem:[#allocation2 + $0x38] sm:$0xff]
        %v293 = vld [vmem:[#allocation2 + $0x40] sm:$0xff]
        %v294 = vld [vmem:[#allocation2 + $0x48] sm:$0xff]
        %v295 = vld [vmem:[#allocation2 + $0x50] sm:$0xff]
        %v296 = vld [vmem:[#allocation2 + $0x58] sm:$0xff]
        %v297 = vld [vmem:[#allocation2 + $0x60] sm:$0xff]
        %v298 = vld [vmem:[#allocation2 + $0x68] sm:$0xff]
        %v299 = vld [vmem:[#allocation2 + $0x70] sm:$0xff]
        %v300 = vld [vmem:[#allocation2 + $0x78] sm:$0xff]
        %v301 = vld [vmem:[#allocation2 + $0x80] sm:$0xff]
        %v302 = vld [vmem:[#allocation2 + $0x88] sm:$0xff]
        %v303 = vld [vmem:[#allocation2 + $0x90] sm:$0xff]
        %v304 = vld [vmem:[#allocation2 + $0x98] sm:$0xff]
        %v305 = vld [vmem:[#allocation2 + $0xa0] sm:$0xff]
        %v306 = vld [vmem:[#allocation2 + $0xa8] sm:$0xff]
        %v307 = vld [vmem:[#allocation2 + $0xb0] sm:$0xff]
        %v308 = vld [vmem:[#allocation2 + $0xb8] sm:$0xff]
        %v309 = vld [vmem:[#allocation2 + $0xc0] sm:$0xff]
        %v310 = vld [vmem:[#allocation2 + $0xc8] sm:$0xff]
        %v311 = vld [vmem:[#allocation2 + $0xd0] sm:$0xff]
        %v312 = vld [vmem:[#allocation2 + $0xd8] sm:$0xff]
        %v313 = vld [vmem:[#allocation2 + $0xe0] sm:$0xff]
        %v314 = vld [vmem:[#allocation2 + $0xe8] sm:$0xff]
        %v315 = vld [vmem:[#allocation2 + $0xf0] sm:$0xff]
        %v316 = vld [vmem:[#allocation2 + $0xf8] sm:$0xff]
        %v317 = vld [vmem:[#allocation2 + $0x100] sm:$0xff]
        %v318 = vld [vmem:[#allocation2 + $0x108] sm:$0xff]
        %v319 = vld [vmem:[#allocation2 + $0x110] sm:$0xff]
        %v320 = vld [vmem:[#allocation2 + $0x118] sm:$0xff]
        %v321 = vld [vmem:[#allocation2 + $0x120] sm:$0xff]
        %v322 = vld [vmem:[#allocation2 + $0x128] sm:$0xff]
        %v323 = vld [vmem:[#allocation2 + $0x130] sm:$0xff]
        %v324 = vld [vmem:[#allocation2 + $0x138] sm:$0xff]
        %v325 = vld [vmem:[#allocation2 + $0x140] sm:$0xff]
        %v326 = vld [vmem:[#allocation2 + $0x148] sm:$0xff]
        %v327 = vld [vmem:[#allocation2 + $0x150] sm:$0xff]
        %v328 = vld [vmem:[#allocation2 + $0x158] sm:$0xff]
        %v329 = vld [vmem:[#allocation2 + $0x160] sm:$0xff]
        %v330 = vld [vmem:[#allocation2 + $0x168] sm:$0xff]
        %v331 = vld [vmem:[#allocation2 + $0x170] sm:$0xff]
        %v332 = vld [vmem:[#allocation2 + $0x178] sm:$0xff]
        %v333 = vld [vmem:[#allocation2 + $0x180] sm:$0xff]
        %v334 = vld [vmem:[#allocation2 + $0x188] sm:$0xff]
        %v336 = vunpack.c.l.b16 %v284
        %v337 = vunpack.c.h.b16 %v284
        %v338 = vpack.c.b16 %v336, %v336
        %v339 = vpack.c.b16 %v337, %v337
        %v391 = vunpack.c.l.b16 %v285
        %v392 = vunpack.c.h.b16 %v285
        %v393 = vunpack.c.l.b16 %v286
        %v394 = vunpack.c.h.b16 %v286
        %v395 = vunpack.c.l.b16 %v287
        %v396 = vunpack.c.h.b16 %v287
        %v397 = vunpack.c.l.b16 %v288
        %v398 = vunpack.c.h.b16 %v288
        %v399 = vunpack.c.l.b16 %v289
        %v400 = vunpack.c.h.b16 %v289
        %v401 = vunpack.c.l.b16 %v290
        %v402 = vunpack.c.h.b16 %v290
        %v403 = vunpack.c.l.b16 %v291
        %v404 = vunpack.c.h.b16 %v291
        %v405 = vunpack.c.l.b16 %v292
        %v406 = vunpack.c.h.b16 %v292
        %v407 = vunpack.c.l.b16 %v293
        %v408 = vunpack.c.h.b16 %v293
        %v409 = vunpack.c.l.b16 %v294
        %v410 = vunpack.c.h.b16 %v294
        %v411 = vunpack.c.l.b16 %v295
        %v412 = vunpack.c.h.b16 %v295
        %v413 = vunpack.c.l.b16 %v296
        %v414 = vunpack.c.h.b16 %v296
        %v415 = vunpack.c.l.b16 %v297
        %v416 = vunpack.c.h.b16 %v297
        %v417 = vunpack.c.l.b16 %v298
        %v418 = vunpack.c.h.b16 %v298
        %v419 = vunpack.c.l.b16 %v299
        %v420 = vunpack.c.h.b16 %v299
        %v421 = vunpack.c.l.b16 %v300
        %v422 = vunpack.c.h.b16 %v300
        %v423 = vunpack.c.l.b16 %v301
        %v424 = vunpack.c.h.b16 %v301
        %v425 = vunpack.c.l.b16 %v302
        %v426 = vunpack.c.h.b16 %v302
        %v427 = vunpack.c.l.b16 %v303
        %v428 = vunpack.c.h.b16 %v303
        %v429 = vunpack.c.l.b16 %v304
        %v430 = vunpack.c.h.b16 %v304
        %v431 = vunpack.c.l.b16 %v305
        %v432 = vunpack.c.h.b16 %v305
        %v433 = vunpack.c.l.b16 %v306
        %v434 = vunpack.c.h.b16 %v306
        %v435 = vunpack.c.l.b16 %v307
        %v436 = vunpack.c.h.b16 %v307
        %v437 = vunpack.c.l.b16 %v308
        %v438 = vunpack.c.h.b16 %v308
        %v439 = vunpack.c.l.b16 %v309
        %v440 = vunpack.c.h.b16 %v309
        %v441 = vunpack.c.l.b16 %v310
        %v442 = vunpack.c.h.b16 %v310
        %v443 = vunpack.c.l.b16 %v311
        %v444 = vunpack.c.h.b16 %v311
        %v445 = vunpack.c.l.b16 %v312
        %v446 = vunpack.c.h.b16 %v312
        %v447 = vunpack.c.l.b16 %v313
        %v448 = vunpack.c.h.b16 %v313
        %v449 = vunpack.c.l.b16 %v314
        %v450 = vunpack.c.h.b16 %v314
        %v451 = vunpack.c.l.b16 %v315
        %v452 = vunpack.c.h.b16 %v315
        %v453 = vunpack.c.l.b16 %v316
        %v454 = vunpack.c.h.b16 %v316
        %v455 = vunpack.c.l.b16 %v317
        %v456 = vunpack.c.h.b16 %v317
        %v457 = vunpack.c.l.b16 %v318
        %v458 = vunpack.c.h.b16 %v318
        %v459 = vunpack.c.l.b16 %v319
        %v460 = vunpack.c.h.b16 %v319
        %v461 = vunpack.c.l.b16 %v320
        %v462 = vunpack.c.h.b16 %v320
        %v463 = vunpack.c.l.b16 %v321
        %v464 = vunpack.c.h.b16 %v321
        %v465 = vunpack.c.l.b16 %v322
        %v466 = vunpack.c.h.b16 %v322
        %v467 = vunpack.c.l.b16 %v323
        %v468 = vunpack.c.h.b16 %v323
        %v469 = vunpack.c.l.b16 %v324
        %v470 = vunpack.c.h.b16 %v324
        %v471 = vunpack.c.l.b16 %v325
        %v472 = vunpack.c.h.b16 %v325
        %v473 = vunpack.c.l.b16 %v326
        %v474 = vunpack.c.h.b16 %v326
        %v475 = vunpack.c.l.b16 %v327
        %v476 = vunpack.c.h.b16 %v327
        %v477 = vunpack.c.l.b16 %v328
        %v478 = vunpack.c.h.b16 %v328
        %v479 = vunpack.c.l.b16 %v329
        %v480 = vunpack.c.h.b16 %v329
        %v481 = vunpack.c.l.b16 %v330
        %v482 = vunpack.c.h.b16 %v330
        %v483 = vunpack.c.l.b16 %v331
        %v484 = vunpack.c.h.b16 %v331
        %v485 = vunpack.c.l.b16 %v332
        %v486 = vunpack.c.h.b16 %v332
        %v487 = vunpack.c.l.b16 %v333
        %v488 = vunpack.c.h.b16 %v333
        %v489 = vunpack.c.l.b16 %v334
        %v490 = vunpack.c.h.b16 %v334
        %v491 = vpack.c.b16 %v395, %v391
        %v492 = vpack.c.b16 %v396, %v392
        %v493 = vpack.c.b16 %v397, %v393
        %v494 = vpack.c.b16 %v398, %v394
        %v495 = vpack.c.b16 %v403, %v399
        %v496 = vpack.c.b16 %v404, %v400
        %v497 = vpack.c.b16 %v405, %v401
        %v498 = vpack.c.b16 %v406, %v402
        %v499 = vpack.c.b16 %v411, %v407
        %v500 = vpack.c.b16 %v412, %v408
        %v501 = vpack.c.b16 %v413, %v409
        %v502 = vpack.c.b16 %v414, %v410
        %v503 = vpack.c.b16 %v419, %v415
        %v504 = vpack.c.b16 %v420, %v416
        %v505 = vpack.c.b16 %v421, %v417
        %v506 = vpack.c.b16 %v422, %v418
        %v507 = vpack.c.b16 %v427, %v423
        %v508 = vpack.c.b16 %v428, %v424
        %v509 = vpack.c.b16 %v429, %v425
        %v510 = vpack.c.b16 %v430, %v426
        %v511 = vpack.c.b16 %v435, %v431
        %v512 = vpack.c.b16 %v436, %v432
        %v513 = vpack.c.b16 %v437, %v433
        %v514 = vpack.c.b16 %v438, %v434
        %v515 = vpack.c.b16 %v443, %v439
        %v516 = vpack.c.b16 %v444, %v440
        %v517 = vpack.c.b16 %v445, %v441
        %v518 = vpack.c.b16 %v446, %v442
        %v519 = vpack.c.b16 %v451, %v447
        %v520 = vpack.c.b16 %v452, %v448
        %v521 = vpack.c.b16 %v453, %v449
        %v522 = vpack.c.b16 %v454, %v450
        %v523 = vpack.c.b16 %v459, %v455
        %v524 = vpack.c.b16 %v460, %v456
        %v525 = vpack.c.b16 %v461, %v457
        %v526 = vpack.c.b16 %v462, %v458
        %v527 = vpack.c.b16 %v467, %v463
        %v528 = vpack.c.b16 %v468, %v464
        %v529 = vpack.c.b16 %v469, %v465
        %v530 = vpack.c.b16 %v470, %v466
        %v531 = vpack.c.b16 %v475, %v471
        %v532 = vpack.c.b16 %v476, %v472
        %v533 = vpack.c.b16 %v477, %v473
        %v534 = vpack.c.b16 %v478, %v474
        %v535 = vpack.c.b16 %v483, %v479
        %v536 = vpack.c.b16 %v484, %v480
        %v537 = vpack.c.b16 %v485, %v481
        %v538 = vpack.c.b16 %v486, %v482
        %v539 = vpack.c.b16 %v487, %v487
        %v540 = vpack.c.b16 %v488, %v488
        %v541 = vpack.c.b16 %v489, %v489
        %v542 = vpack.c.b16 %v490, %v490
        %vm591 = vcmask 588800
        %v593 = vsel %vm591, %v339, 0
        %vm595 = vcmask 1043456
        %v597 = vsel %vm595, %v539, 0
        %v600 = vsel %vm595, %v540, 0
        %v603 = vsel %vm595, %v541, 0
        %v606 = vsel %vm595, %v542, 0
        %608 = vmatprep.subr.bf16.mxu0 %v492
        %609 = vmatpush1.bf16.msra.mxu0 %v491
        %610 = vmatprep.subr.bf16.mxu0 %v496
        %611 = vmatpush1.bf16.msra.mxu0 %v495
        %612 = vmatprep.subr.bf16.mxu0 %v500
        %613 = vmatpush1.bf16.msra.mxu0 %v499
        %614 = vmatprep.subr.bf16.mxu0 %v504
        %615 = vmatpush1.bf16.msra.mxu0 %v503
        %616 = vmatprep.subr.bf16.mxu0 %v508
        %617 = vmatpush1.bf16.msra.mxu0 %v507
        %618 = vmatprep.subr.bf16.mxu0 %v512
        %619 = vmatpush1.bf16.msra.mxu0 %v511
        %620 = vmatprep.subr.bf16.mxu0 %v516
        %621 = vmatpush1.bf16.msra.mxu0 %v515
        %622 = vmatprep.subr.bf16.mxu0 %v520
        %623 = vmatpush1.bf16.msra.mxu0 %v519
        %624 = vmatprep.subr.bf16.mxu0 %v524
        %625 = vmatpush1.bf16.msra.mxu0 %v523
        %626 = vmatprep.subr.bf16.mxu0 %v528
        %627 = vmatpush1.bf16.msra.mxu0 %v527
        %628 = vmatprep.subr.bf16.mxu0 %v532
        %629 = vmatpush1.bf16.msra.mxu0 %v531
        %630 = vmatprep.subr.bf16.mxu0 %v536
        %631 = vmatpush1.bf16.msra.mxu0 %v535
        %632 = vmatprep.subr.bf16.mxu0 %v600
        %633 = vmatpush1.bf16.msra.mxu0 %v597
        %634 = vmatprep.subr.bf16.mxu0 0
        %635 = vmatpush1.bf16.msra.mxu0 0
        %636 = vmatprep.subr.bf16.mxu0 0
        %637 = vmatpush1.bf16.msra.mxu0 0
        %638 = vmatprep.subr.bf16.mxu0 0
        %639 = vmatpush1.bf16.msra.mxu0 0
        %640 = vmatprep.mubr.bf16.mxu0 %v593
        %641 = vmatmul.mubr.bf16.gmra.mrb[0].mxu0 %v338
        %v642 = vpop.f32.mrb[0].mxu0
        %v643 = vadd.f32 0.0, %v642
        %v644 = vpop.f32.mrb[0].mxu0
        %v645 = vadd.f32 0.0, %v644
        %v646 = vpop.f32.mrb[0].mxu0
        %v647 = vpop.f32.mrb[0].mxu0
        %648 = vdwg.mxu0
        %649 = vmatprep.subr.bf16.mxu0 %v494
        %650 = vmatpush1.bf16.msra.mxu0 %v493
        %651 = vmatprep.subr.bf16.mxu0 %v498
        %652 = vmatpush1.bf16.msra.mxu0 %v497
        %653 = vmatprep.subr.bf16.mxu0 %v502
        %654 = vmatpush1.bf16.msra.mxu0 %v501
        %655 = vmatprep.subr.bf16.mxu0 %v506
        %656 = vmatpush1.bf16.msra.mxu0 %v505
        %657 = vmatprep.subr.bf16.mxu0 %v510
        %658 = vmatpush1.bf16.msra.mxu0 %v509
        %659 = vmatprep.subr.bf16.mxu0 %v514
        %660 = vmatpush1.bf16.msra.mxu0 %v513
        %661 = vmatprep.subr.bf16.mxu0 %v518
        %662 = vmatpush1.bf16.msra.mxu0 %v517
        %663 = vmatprep.subr.bf16.mxu0 %v522
        %664 = vmatpush1.bf16.msra.mxu0 %v521
        %665 = vmatprep.subr.bf16.mxu0 %v526
        %666 = vmatpush1.bf16.msra.mxu0 %v525
        %667 = vmatprep.subr.bf16.mxu0 %v530
        %668 = vmatpush1.bf16.msra.mxu0 %v529
        %669 = vmatprep.subr.bf16.mxu0 %v534
        %670 = vmatpush1.bf16.msra.mxu0 %v533
        %671 = vmatprep.subr.bf16.mxu0 %v538
        %672 = vmatpush1.bf16.msra.mxu0 %v537
        %673 = vmatprep.subr.bf16.mxu0 %v606
        %674 = vmatpush1.bf16.msra.mxu0 %v603
        %675 = vmatprep.subr.bf16.mxu0 0
        %676 = vmatpush1.bf16.msra.mxu0 0
        %677 = vmatprep.subr.bf16.mxu0 0
        %678 = vmatpush1.bf16.msra.mxu0 0
        %679 = vmatprep.subr.bf16.mxu0 0
        %680 = vmatpush1.bf16.msra.mxu0 0
        %681 = vmatprep.mubr.bf16.mxu0 %v593
        %682 = vmatmul.mubr.bf16.gmra.mrb[0].mxu0 %v338
        %v683 = vpop.f32.mrb[0].mxu0
        %v684 = vadd.f32 0.0, %v683
        %v685 = vpop.f32.mrb[0].mxu0
        %v686 = vadd.f32 0.0, %v685
        %v687 = vpop.f32.mrb[0].mxu0
        %v688 = vpop.f32.mrb[0].mxu0
        %689 = vdwg.mxu0
        %s690 = scalar_lea.vmem [#allocation2], 400
        %v691 = vld [vmem:[%s690] sm:$0xff]
        %v692 = vld [vmem:[%s690 + $0x8] sm:$0xff]
        %v693 = vld [vmem:[%s690 + $0x10] sm:$0xff]
        %v694 = vld [vmem:[%s690 + $0x18] sm:$0xff]
        %v695 = vld [vmem:[%s690 + $0x20] sm:$0xff]
        %v696 = vld [vmem:[%s690 + $0x28] sm:$0xff]
        %v697 = vld [vmem:[%s690 + $0x30] sm:$0xff]
        %v698 = vld [vmem:[%s690 + $0x38] sm:$0xff]
        %v699 = vld [vmem:[%s690 + $0x40] sm:$0xff]
        %v700 = vld [vmem:[%s690 + $0x48] sm:$0xff]
        %v701 = vld [vmem:[%s690 + $0x50] sm:$0xff]
        %v702 = vld [vmem:[%s690 + $0x58] sm:$0xff]
        %v703 = vld [vmem:[%s690 + $0x60] sm:$0xff]
        %v704 = vld [vmem:[%s690 + $0x68] sm:$0xff]
        %v705 = vld [vmem:[%s690 + $0x70] sm:$0xff]
        %v706 = vld [vmem:[%s690 + $0x78] sm:$0xff]
        %v707 = vld [vmem:[%s690 + $0x80] sm:$0xff]
        %v708 = vld [vmem:[%s690 + $0x88] sm:$0xff]
        %v709 = vld [vmem:[%s690 + $0x90] sm:$0xff]
        %v710 = vld [vmem:[%s690 + $0x98] sm:$0xff]
        %v711 = vld [vmem:[%s690 + $0xa0] sm:$0xff]
        %v712 = vld [vmem:[%s690 + $0xa8] sm:$0xff]
        %v713 = vld [vmem:[%s690 + $0xb0] sm:$0xff]
        %v714 = vld [vmem:[%s690 + $0xb8] sm:$0xff]
        %v715 = vld [vmem:[%s690 + $0xc0] sm:$0xff]
        %v716 = vld [vmem:[%s690 + $0xc8] sm:$0xff]
        %v717 = vld [vmem:[%s690 + $0xd0] sm:$0xff]
        %v718 = vld [vmem:[%s690 + $0xd8] sm:$0xff]
        %v719 = vld [vmem:[%s690 + $0xe0] sm:$0xff]
        %v720 = vld [vmem:[%s690 + $0xe8] sm:$0xff]
        %v721 = vld [vmem:[%s690 + $0xf0] sm:$0xff]
        %v722 = vld [vmem:[%s690 + $0xf8] sm:$0xff]
        %v723 = vld [vmem:[%s690 + $0x100] sm:$0xff]
        %v724 = vld [vmem:[%s690 + $0x108] sm:$0xff]
        %v725 = vld [vmem:[%s690 + $0x110] sm:$0xff]
        %v726 = vld [vmem:[%s690 + $0x118] sm:$0xff]
        %v727 = vld [vmem:[%s690 + $0x120] sm:$0xff]
        %v728 = vld [vmem:[%s690 + $0x128] sm:$0xff]
        %v729 = vld [vmem:[%s690 + $0x130] sm:$0xff]
        %v730 = vld [vmem:[%s690 + $0x138] sm:$0xff]
        %v731 = vld [vmem:[%s690 + $0x140] sm:$0xff]
        %v732 = vld [vmem:[%s690 + $0x148] sm:$0xff]
        %v733 = vld [vmem:[%s690 + $0x150] sm:$0xff]
        %v734 = vld [vmem:[%s690 + $0x158] sm:$0xff]
        %v735 = vld [vmem:[%s690 + $0x160] sm:$0xff]
        %v736 = vld [vmem:[%s690 + $0x168] sm:$0xff]
        %v737 = vld [vmem:[%s690 + $0x170] sm:$0xff]
        %v738 = vld [vmem:[%s690 + $0x178] sm:$0xff]
        %v739 = vld [vmem:[%s690 + $0x180] sm:$0xff]
        %v740 = vld [vmem:[%s690 + $0x188] sm:$0xff]
        %s741 = scalar_lea.vmem [#allocation2], 800
        %v742 = vld [vmem:[%s741] sm:$0xff]
        %v743 = vld [vmem:[%s741 + $0x8] sm:$0xff]
        %v744 = vld [vmem:[%s741 + $0x10] sm:$0xff]
        %v745 = vld [vmem:[%s741 + $0x18] sm:$0xff]
        %v746 = vld [vmem:[%s741 + $0x20] sm:$0xff]
        %v747 = vld [vmem:[%s741 + $0x28] sm:$0xff]
        %v748 = vld [vmem:[%s741 + $0x30] sm:$0xff]
        %v749 = vld [vmem:[%s741 + $0x38] sm:$0xff]
        %v750 = vld [vmem:[%s741 + $0x40] sm:$0xff]
        %v751 = vld [vmem:[%s741 + $0x48] sm:$0xff]
        %v752 = vld [vmem:[%s741 + $0x50] sm:$0xff]
        %v753 = vld [vmem:[%s741 + $0x58] sm:$0xff]
        %v754 = vld [vmem:[%s741 + $0x60] sm:$0xff]
        %v755 = vld [vmem:[%s741 + $0x68] sm:$0xff]
        %v756 = vld [vmem:[%s741 + $0x70] sm:$0xff]
        %v757 = vld [vmem:[%s741 + $0x78] sm:$0xff]
        %v758 = vld [vmem:[%s741 + $0x80] sm:$0xff]
        %v759 = vld [vmem:[%s741 + $0x88] sm:$0xff]
        %v760 = vld [vmem:[%s741 + $0x90] sm:$0xff]
        %v761 = vld [vmem:[%s741 + $0x98] sm:$0xff]
        %v762 = vld [vmem:[%s741 + $0xa0] sm:$0xff]
        %v763 = vld [vmem:[%s741 + $0xa8] sm:$0xff]
        %v764 = vld [vmem:[%s741 + $0xb0] sm:$0xff]
        %v765 = vld [vmem:[%s741 + $0xb8] sm:$0xff]
        %v766 = vld [vmem:[%s741 + $0xc0] sm:$0xff]
        %v767 = vld [vmem:[%s741 + $0xc8] sm:$0xff]
        %v768 = vld [vmem:[%s741 + $0xd0] sm:$0xff]
        %v769 = vld [vmem:[%s741 + $0xd8] sm:$0xff]
        %v770 = vld [vmem:[%s741 + $0xe0] sm:$0xff]
        %v771 = vld [vmem:[%s741 + $0xe8] sm:$0xff]
        %v772 = vld [vmem:[%s741 + $0xf0] sm:$0xff]
        %v773 = vld [vmem:[%s741 + $0xf8] sm:$0xff]
        %v774 = vld [vmem:[%s741 + $0x100] sm:$0xff]
        %v775 = vld [vmem:[%s741 + $0x108] sm:$0xff]
        %v776 = vld [vmem:[%s741 + $0x110] sm:$0xff]
        %v777 = vld [vmem:[%s741 + $0x118] sm:$0xff]
        %v778 = vld [vmem:[%s741 + $0x120] sm:$0xff]
        %v779 = vld [vmem:[%s741 + $0x128] sm:$0xff]
        %v780 = vld [vmem:[%s741 + $0x130] sm:$0xff]
        %v781 = vld [vmem:[%s741 + $0x138] sm:$0xff]
        %v782 = vld [vmem:[%s741 + $0x140] sm:$0xff]
        %v783 = vld [vmem:[%s741 + $0x148] sm:$0xff]
        %v784 = vld [vmem:[%s741 + $0x150] sm:$0xff]
        %v785 = vld [vmem:[%s741 + $0x158] sm:$0xff]
        %v786 = vld [vmem:[%s741 + $0x160] sm:$0xff]
        %v787 = vld [vmem:[%s741 + $0x168] sm:$0xff]
        %v788 = vld [vmem:[%s741 + $0x170] sm:$0xff]
        %v789 = vld [vmem:[%s741 + $0x178] sm:$0xff]
        %v790 = vld [vmem:[%s741 + $0x180] sm:$0xff]
        %v791 = vld [vmem:[%s741 + $0x188] sm:$0xff]
        %v842 = vunpack.c.l.b16 %v742
        %v843 = vunpack.c.h.b16 %v742
        %v844 = vunpack.c.l.b16 %v743
        %v845 = vunpack.c.h.b16 %v743
        %v846 = vunpack.c.l.b16 %v744
        %v847 = vunpack.c.h.b16 %v744
        %v848 = vunpack.c.l.b16 %v745
        %v849 = vunpack.c.h.b16 %v745
        %v850 = vunpack.c.l.b16 %v746
        %v851 = vunpack.c.h.b16 %v746
        %v852 = vunpack.c.l.b16 %v747
        %v853 = vunpack.c.h.b16 %v747
        %v854 = vunpack.c.l.b16 %v748
        %v855 = vunpack.c.h.b16 %v748
        %v856 = vunpack.c.l.b16 %v749
        %v857 = vunpack.c.h.b16 %v749
        %v858 = vunpack.c.l.b16 %v750
        %v859 = vunpack.c.h.b16 %v750
        %v860 = vunpack.c.l.b16 %v751
        %v861 = vunpack.c.h.b16 %v751
        %v862 = vunpack.c.l.b16 %v752
        %v863 = vunpack.c.h.b16 %v752
        %v864 = vunpack.c.l.b16 %v753
        %v865 = vunpack.c.h.b16 %v753
        %v866 = vunpack.c.l.b16 %v754
        %v867 = vunpack.c.h.b16 %v754
        %v868 = vunpack.c.l.b16 %v755
        %v869 = vunpack.c.h.b16 %v755
        %v870 = vunpack.c.l.b16 %v756
        %v871 = vunpack.c.h.b16 %v756
        %v872 = vunpack.c.l.b16 %v757
        %v873 = vunpack.c.h.b16 %v757
        %v874 = vunpack.c.l.b16 %v758
        %v875 = vunpack.c.h.b16 %v758
        %v876 = vunpack.c.l.b16 %v759
        %v877 = vunpack.c.h.b16 %v759
        %v878 = vunpack.c.l.b16 %v760
        %v879 = vunpack.c.h.b16 %v760
        %v880 = vunpack.c.l.b16 %v761
        %v881 = vunpack.c.h.b16 %v761
        %v882 = vunpack.c.l.b16 %v762
        %v883 = vunpack.c.h.b16 %v762
        %v884 = vunpack.c.l.b16 %v763
        %v885 = vunpack.c.h.b16 %v763
        %v886 = vunpack.c.l.b16 %v764
        %v887 = vunpack.c.h.b16 %v764
        %v888 = vunpack.c.l.b16 %v765
        %v889 = vunpack.c.h.b16 %v765
        %v890 = vunpack.c.l.b16 %v766
        %v891 = vunpack.c.h.b16 %v766
        %v892 = vunpack.c.l.b16 %v767
        %v893 = vunpack.c.h.b16 %v767
        %v894 = vunpack.c.l.b16 %v768
        %v895 = vunpack.c.h.b16 %v768
        %v896 = vunpack.c.l.b16 %v769
        %v897 = vunpack.c.h.b16 %v769
        %v898 = vunpack.c.l.b16 %v770
        %v899 = vunpack.c.h.b16 %v770
        %v900 = vunpack.c.l.b16 %v771
        %v901 = vunpack.c.h.b16 %v771
        %v902 = vunpack.c.l.b16 %v772
        %v903 = vunpack.c.h.b16 %v772
        %v904 = vunpack.c.l.b16 %v773
        %v905 = vunpack.c.h.b16 %v773
        %v906 = vunpack.c.l.b16 %v774
        %v907 = vunpack.c.h.b16 %v774
        %v908 = vunpack.c.l.b16 %v775
        %v909 = vunpack.c.h.b16 %v775
        %v910 = vunpack.c.l.b16 %v776
        %v911 = vunpack.c.h.b16 %v776
        %v912 = vunpack.c.l.b16 %v777
        %v913 = vunpack.c.h.b16 %v777
        %v914 = vunpack.c.l.b16 %v778
        %v915 = vunpack.c.h.b16 %v778
        %v916 = vunpack.c.l.b16 %v779
        %v917 = vunpack.c.h.b16 %v779
        %v918 = vunpack.c.l.b16 %v780
        %v919 = vunpack.c.h.b16 %v780
        %v920 = vunpack.c.l.b16 %v781
        %v921 = vunpack.c.h.b16 %v781
        %v922 = vunpack.c.l.b16 %v782
        %v923 = vunpack.c.h.b16 %v782
        %v924 = vunpack.c.l.b16 %v783
        %v925 = vunpack.c.h.b16 %v783
        %v926 = vunpack.c.l.b16 %v784
        %v927 = vunpack.c.h.b16 %v784
        %v928 = vunpack.c.l.b16 %v785
        %v929 = vunpack.c.h.b16 %v785
        %v930 = vunpack.c.l.b16 %v786
        %v931 = vunpack.c.h.b16 %v786
        %v932 = vunpack.c.l.b16 %v787
        %v933 = vunpack.c.h.b16 %v787
        %v934 = vunpack.c.l.b16 %v788
        %v935 = vunpack.c.h.b16 %v788
        %v936 = vunpack.c.l.b16 %v789
        %v937 = vunpack.c.h.b16 %v789
        %v938 = vunpack.c.l.b16 %v790
        %v939 = vunpack.c.h.b16 %v790
        %v940 = vunpack.c.l.b16 %v791
        %v941 = vunpack.c.h.b16 %v791
        %v942 = vpack.c.b16 %v846, %v842
        %v943 = vpack.c.b16 %v847, %v843
        %v944 = vpack.c.b16 %v848, %v844
        %v945 = vpack.c.b16 %v849, %v845
        %v946 = vpack.c.b16 %v854, %v850
        %v947 = vpack.c.b16 %v855, %v851
        %v948 = vpack.c.b16 %v856, %v852
        %v949 = vpack.c.b16 %v857, %v853
        %v950 = vpack.c.b16 %v862, %v858
        %v951 = vpack.c.b16 %v863, %v859
        %v952 = vpack.c.b16 %v864, %v860
        %v953 = vpack.c.b16 %v865, %v861
        %v954 = vpack.c.b16 %v870, %v866
        %v955 = vpack.c.b16 %v871, %v867
        %v956 = vpack.c.b16 %v872, %v868
        %v957 = vpack.c.b16 %v873, %v869
        %v958 = vpack.c.b16 %v878, %v874
        %v959 = vpack.c.b16 %v879, %v875
        %v960 = vpack.c.b16 %v880, %v876
        %v961 = vpack.c.b16 %v881, %v877
        %v962 = vpack.c.b16 %v886, %v882
        %v963 = vpack.c.b16 %v887, %v883
        %v964 = vpack.c.b16 %v888, %v884
        %v965 = vpack.c.b16 %v889, %v885
        %v966 = vpack.c.b16 %v894, %v890
        %v967 = vpack.c.b16 %v895, %v891
        %v968 = vpack.c.b16 %v896, %v892
        %v969 = vpack.c.b16 %v897, %v893
        %v970 = vpack.c.b16 %v902, %v898
        %v971 = vpack.c.b16 %v903, %v899
        %v972 = vpack.c.b16 %v904, %v900
        %v973 = vpack.c.b16 %v905, %v901
        %v974 = vpack.c.b16 %v910, %v906
        %v975 = vpack.c.b16 %v911, %v907
        %v976 = vpack.c.b16 %v912, %v908
        %v977 = vpack.c.b16 %v913, %v909
        %v978 = vpack.c.b16 %v918, %v914
        %v979 = vpack.c.b16 %v919, %v915
        %v980 = vpack.c.b16 %v920, %v916
        %v981 = vpack.c.b16 %v921, %v917
        %v982 = vpack.c.b16 %v926, %v922
        %v983 = vpack.c.b16 %v927, %v923
        %v984 = vpack.c.b16 %v928, %v924
        %v985 = vpack.c.b16 %v929, %v925
        %v986 = vpack.c.b16 %v934, %v930
        %v987 = vpack.c.b16 %v935, %v931
        %v988 = vpack.c.b16 %v936, %v932
        %v989 = vpack.c.b16 %v937, %v933
        %v990 = vpack.c.b16 %v938, %v938
        %v991 = vpack.c.b16 %v939, %v939
        %v992 = vpack.c.b16 %v940, %v940
        %v993 = vpack.c.b16 %v941, %v941
        %v1043 = vsel %vm595, %v990, 0
        %v1046 = vsel %vm595, %v991, 0
        %v1049 = vsel %vm595, %v992, 0
        %v1052 = vsel %vm595, %v993, 0
        %1054 = vmatprep.subr.bf16.mxu0 %v943
        %1055 = vmatpush1.bf16.msra.mxu0 %v942
        %1056 = vmatprep.subr.bf16.mxu0 %v947
        %1057 = vmatpush1.bf16.msra.mxu0 %v946
        %1058 = vmatprep.subr.bf16.mxu0 %v951
        %1059 = vmatpush1.bf16.msra.mxu0 %v950
        %1060 = vmatprep.subr.bf16.mxu0 %v955
        %1061 = vmatpush1.bf16.msra.mxu0 %v954
        %1062 = vmatprep.subr.bf16.mxu0 %v959
        %1063 = vmatpush1.bf16.msra.mxu0 %v958
        %1064 = vmatprep.subr.bf16.mxu0 %v963
        %1065 = vmatpush1.bf16.msra.mxu0 %v962
        %1066 = vmatprep.subr.bf16.mxu0 %v967
        %1067 = vmatpush1.bf16.msra.mxu0 %v966
        %1068 = vmatprep.subr.bf16.mxu0 %v971
        %1069 = vmatpush1.bf16.msra.mxu0 %v970
        %1070 = vmatprep.subr.bf16.mxu0 %v975
        %1071 = vmatpush1.bf16.msra.mxu0 %v974
        %1072 = vmatprep.subr.bf16.mxu0 %v979
        %1073 = vmatpush1.bf16.msra.mxu0 %v978
        %1074 = vmatprep.subr.bf16.mxu0 %v983
        %1075 = vmatpush1.bf16.msra.mxu0 %v982
        %1076 = vmatprep.subr.bf16.mxu0 %v987
        %1077 = vmatpush1.bf16.msra.mxu0 %v986
        %1078 = vmatprep.subr.bf16.mxu0 %v1046
        %1079 = vmatpush1.bf16.msra.mxu0 %v1043
        %1080 = vmatprep.subr.bf16.mxu0 0
        %1081 = vmatpush1.bf16.msra.mxu0 0
        %1082 = vmatprep.subr.bf16.mxu0 0
        %1083 = vmatpush1.bf16.msra.mxu0 0
        %1084 = vmatprep.subr.bf16.mxu0 0
        %1085 = vmatpush1.bf16.msra.mxu0 0
        %1086 = vmatprep.mubr.bf16.mxu0 %v593
        %1087 = vmatmul.mubr.bf16.gmra.mrb[0].mxu0 %v338
        %v1088 = vpop.f32.mrb[0].mxu0
        %v1089 = vadd.f32 0.0, %v1088
        %v1090 = vpop.f32.mrb[0].mxu0
        %v1091 = vadd.f32 0.0, %v1090
        %v1092 = vpop.f32.mrb[0].mxu0
        %v1093 = vpop.f32.mrb[0].mxu0
        %1094 = vdwg.mxu0
        %1095 = vmatprep.subr.bf16.mxu0 %v945
        %1096 = vmatpush1.bf16.msra.mxu0 %v944
        %1097 = vmatprep.subr.bf16.mxu0 %v949
        %1098 = vmatpush1.bf16.msra.mxu0 %v948
        %1099 = vmatprep.subr.bf16.mxu0 %v953
        %1100 = vmatpush1.bf16.msra.mxu0 %v952
        %1101 = vmatprep.subr.bf16.mxu0 %v957
        %1102 = vmatpush1.bf16.msra.mxu0 %v956
        %1103 = vmatprep.subr.bf16.mxu0 %v961
        %1104 = vmatpush1.bf16.msra.mxu0 %v960
        %1105 = vmatprep.subr.bf16.mxu0 %v965
        %1106 = vmatpush1.bf16.msra.mxu0 %v964
        %1107 = vmatprep.subr.bf16.mxu0 %v969
        %1108 = vmatpush1.bf16.msra.mxu0 %v968
        %1109 = vmatprep.subr.bf16.mxu0 %v973
        %1110 = vmatpush1.bf16.msra.mxu0 %v972
        %1111 = vmatprep.subr.bf16.mxu0 %v977
        %1112 = vmatpush1.bf16.msra.mxu0 %v976
        %1113 = vmatprep.subr.bf16.mxu0 %v981
        %1114 = vmatpush1.bf16.msra.mxu0 %v980
        %1115 = vmatprep.subr.bf16.mxu0 %v985
        %1116 = vmatpush1.bf16.msra.mxu0 %v984
        %1117 = vmatprep.subr.bf16.mxu0 %v989
        %1118 = vmatpush1.bf16.msra.mxu0 %v988
        %1119 = vmatprep.subr.bf16.mxu0 %v1052
        %1120 = vmatpush1.bf16.msra.mxu0 %v1049
        %1121 = vmatprep.subr.bf16.mxu0 0
        %1122 = vmatpush1.bf16.msra.mxu0 0
        %1123 = vmatprep.subr.bf16.mxu0 0
        %1124 = vmatpush1.bf16.msra.mxu0 0
        %1125 = vmatprep.subr.bf16.mxu0 0
        %1126 = vmatpush1.bf16.msra.mxu0 0
        %1127 = vmatprep.mubr.bf16.mxu0 %v593
        %1128 = vmatmul.mubr.bf16.gmra.mrb[0].mxu0 %v338
        %v1129 = vpop.f32.mrb[0].mxu0
        %v1130 = vadd.f32 0.0, %v1129
        %v1131 = vpop.f32.mrb[0].mxu0
        %v1132 = vadd.f32 0.0, %v1131
        %v1133 = vpop.f32.mrb[0].mxu0
        %v1134 = vpop.f32.mrb[0].mxu0
        %1135 = vdwg.mxu0
        %v1136 = vld [vmem:[%s2] sm:$0xf]
        %v1138 = vlaneseq
        %v1139 = vshrl.u32 %v1138, 7
        %v1140 = vsub.s32 0, %v1139
        %v1141 = vrot.slane %v1136, %v1140
        %v1142 = vlaneseq
        %v1143 = vshrl.u32 %v1142, 7
        %v1144 = vsub.s32 1, %v1143
        %v1145 = vrot.slane %v1136, %v1144
        %v1146 = vlaneseq
        %v1147 = vshrl.u32 %v1146, 7
        %v1148 = vsub.s32 2, %v1147
        %v1149 = vrot.slane %v1136, %v1148
        %v1150 = vlaneseq
        %v1151 = vshrl.u32 %v1150, 7
        %v1152 = vsub.s32 3, %v1151
        %v1153 = vrot.slane %v1136, %v1152
        %v1208 = vunpack.c.l.b16 %v691
        %v1209 = vunpack.c.h.b16 %v691
        %v1210 = vunpack.c.l.b16 %v692
        %v1211 = vunpack.c.h.b16 %v692
        %v1212 = vunpack.c.l.b16 %v693
        %v1213 = vunpack.c.h.b16 %v693
        %v1214 = vunpack.c.l.b16 %v694
        %v1215 = vunpack.c.h.b16 %v694
        %v1216 = vunpack.c.l.b16 %v695
        %v1217 = vunpack.c.h.b16 %v695
        %v1218 = vunpack.c.l.b16 %v696
        %v1219 = vunpack.c.h.b16 %v696
        %v1220 = vunpack.c.l.b16 %v697
        %v1221 = vunpack.c.h.b16 %v697
        %v1222 = vunpack.c.l.b16 %v698
        %v1223 = vunpack.c.h.b16 %v698
        %v1224 = vunpack.c.l.b16 %v699
        %v1225 = vunpack.c.h.b16 %v699
        %v1226 = vunpack.c.l.b16 %v700
        %v1227 = vunpack.c.h.b16 %v700
        %v1228 = vunpack.c.l.b16 %v701
        %v1229 = vunpack.c.h.b16 %v701
        %v1230 = vunpack.c.l.b16 %v702
        %v1231 = vunpack.c.h.b16 %v702
        %v1232 = vunpack.c.l.b16 %v703
        %v1233 = vunpack.c.h.b16 %v703
        %v1234 = vunpack.c.l.b16 %v704
        %v1235 = vunpack.c.h.b16 %v704
        %v1236 = vunpack.c.l.b16 %v705
        %v1237 = vunpack.c.h.b16 %v705
        %v1238 = vunpack.c.l.b16 %v706
        %v1239 = vunpack.c.h.b16 %v706
        %v1240 = vunpack.c.l.b16 %v707
        %v1241 = vunpack.c.h.b16 %v707
        %v1242 = vunpack.c.l.b16 %v708
        %v1243 = vunpack.c.h.b16 %v708
        %v1244 = vunpack.c.l.b16 %v709
        %v1245 = vunpack.c.h.b16 %v709
        %v1246 = vunpack.c.l.b16 %v710
        %v1247 = vunpack.c.h.b16 %v710
        %v1248 = vunpack.c.l.b16 %v711
        %v1249 = vunpack.c.h.b16 %v711
        %v1250 = vunpack.c.l.b16 %v712
        %v1251 = vunpack.c.h.b16 %v712
        %v1252 = vunpack.c.l.b16 %v713
        %v1253 = vunpack.c.h.b16 %v713
        %v1254 = vunpack.c.l.b16 %v714
        %v1255 = vunpack.c.h.b16 %v714
        %v1256 = vunpack.c.l.b16 %v715
        %v1257 = vunpack.c.h.b16 %v715
        %v1258 = vunpack.c.l.b16 %v716
        %v1259 = vunpack.c.h.b16 %v716
        %v1260 = vunpack.c.l.b16 %v717
        %v1261 = vunpack.c.h.b16 %v717
        %v1262 = vunpack.c.l.b16 %v718
        %v1263 = vunpack.c.h.b16 %v718
        %v1264 = vunpack.c.l.b16 %v719
        %v1265 = vunpack.c.h.b16 %v719
        %v1266 = vunpack.c.l.b16 %v720
        %v1267 = vunpack.c.h.b16 %v720
        %v1268 = vunpack.c.l.b16 %v721
        %v1269 = vunpack.c.h.b16 %v721
        %v1270 = vunpack.c.l.b16 %v722
        %v1271 = vunpack.c.h.b16 %v722
        %v1272 = vunpack.c.l.b16 %v723
        %v1273 = vunpack.c.h.b16 %v723
        %v1274 = vunpack.c.l.b16 %v724
        %v1275 = vunpack.c.h.b16 %v724
        %v1276 = vunpack.c.l.b16 %v725
        %v1277 = vunpack.c.h.b16 %v725
        %v1278 = vunpack.c.l.b16 %v726
        %v1279 = vunpack.c.h.b16 %v726
        %v1280 = vunpack.c.l.b16 %v727
        %v1281 = vunpack.c.h.b16 %v727
        %v1282 = vunpack.c.l.b16 %v728
        %v1283 = vunpack.c.h.b16 %v728
        %v1284 = vunpack.c.l.b16 %v729
        %v1285 = vunpack.c.h.b16 %v729
        %v1286 = vunpack.c.l.b16 %v730
        %v1287 = vunpack.c.h.b16 %v730
        %v1288 = vunpack.c.l.b16 %v731
        %v1289 = vunpack.c.h.b16 %v731
        %v1290 = vunpack.c.l.b16 %v732
        %v1291 = vunpack.c.h.b16 %v732
        %v1292 = vunpack.c.l.b16 %v733
        %v1293 = vunpack.c.h.b16 %v733
        %v1294 = vunpack.c.l.b16 %v734
        %v1295 = vunpack.c.h.b16 %v734
        %v1296 = vunpack.c.l.b16 %v735
        %v1297 = vunpack.c.h.b16 %v735
        %v1298 = vunpack.c.l.b16 %v736
        %v1299 = vunpack.c.h.b16 %v736
        %v1300 = vunpack.c.l.b16 %v737
        %v1301 = vunpack.c.h.b16 %v737
        %v1302 = vunpack.c.l.b16 %v738
        %v1303 = vunpack.c.h.b16 %v738
        %v1304 = vunpack.c.l.b16 %v739
        %v1305 = vunpack.c.h.b16 %v739
        %v1306 = vunpack.c.l.b16 %v740
        %v1307 = vunpack.c.h.b16 %v740
        %v1308 = vpack.c.b16 %v1212, %v1208
        %v1309 = vpack.c.b16 %v1213, %v1209
        %v1310 = vpack.c.b16 %v1214, %v1210
        %v1311 = vpack.c.b16 %v1215, %v1211
        %v1312 = vpack.c.b16 %v1220, %v1216
        %v1313 = vpack.c.b16 %v1221, %v1217
        %v1314 = vpack.c.b16 %v1222, %v1218
        %v1315 = vpack.c.b16 %v1223, %v1219
        %v1316 = vpack.c.b16 %v1228, %v1224
        %v1317 = vpack.c.b16 %v1229, %v1225
        %v1318 = vpack.c.b16 %v1230, %v1226
        %v1319 = vpack.c.b16 %v1231, %v1227
        %v1320 = vpack.c.b16 %v1236, %v1232
        %v1321 = vpack.c.b16 %v1237, %v1233
        %v1322 = vpack.c.b16 %v1238, %v1234
        %v1323 = vpack.c.b16 %v1239, %v1235
        %v1324 = vpack.c.b16 %v1244, %v1240
        %v1325 = vpack.c.b16 %v1245, %v1241
        %v1326 = vpack.c.b16 %v1246, %v1242
        %v1327 = vpack.c.b16 %v1247, %v1243
        %v1328 = vpack.c.b16 %v1252, %v1248
        %v1329 = vpack.c.b16 %v1253, %v1249
        %v1330 = vpack.c.b16 %v1254, %v1250
        %v1331 = vpack.c.b16 %v1255, %v1251
        %v1332 = vpack.c.b16 %v1260, %v1256
        %v1333 = vpack.c.b16 %v1261, %v1257
        %v1334 = vpack.c.b16 %v1262, %v1258
        %v1335 = vpack.c.b16 %v1263, %v1259
        %v1336 = vpack.c.b16 %v1268, %v1264
        %v1337 = vpack.c.b16 %v1269, %v1265
        %v1338 = vpack.c.b16 %v1270, %v1266
        %v1339 = vpack.c.b16 %v1271, %v1267
        %v1340 = vpack.c.b16 %v1276, %v1272
        %v1341 = vpack.c.b16 %v1277, %v1273
        %v1342 = vpack.c.b16 %v1278, %v1274
        %v1343 = vpack.c.b16 %v1279, %v1275
        %v1344 = vpack.c.b16 %v1284, %v1280
        %v1345 = vpack.c.b16 %v1285, %v1281
        %v1346 = vpack.c.b16 %v1286, %v1282
        %v1347 = vpack.c.b16 %v1287, %v1283
        %v1348 = vpack.c.b16 %v1292, %v1288
        %v1349 = vpack.c.b16 %v1293, %v1289
        %v1350 = vpack.c.b16 %v1294, %v1290
        %v1351 = vpack.c.b16 %v1295, %v1291
        %v1352 = vpack.c.b16 %v1300, %v1296
        %v1353 = vpack.c.b16 %v1301, %v1297
        %v1354 = vpack.c.b16 %v1302, %v1298
        %v1355 = vpack.c.b16 %v1303, %v1299
        %v1356 = vpack.c.b16 %v1304, %v1304
        %v1357 = vpack.c.b16 %v1305, %v1305
        %v1358 = vpack.c.b16 %v1306, %v1306
        %v1359 = vpack.c.b16 %v1307, %v1307
        %v1409 = vsel %vm595, %v1356, 0
        %v1412 = vsel %vm595, %v1357, 0
        %v1415 = vsel %vm595, %v1358, 0
        %v1418 = vsel %vm595, %v1359, 0
        %1420 = vmatprep.subr.bf16.mxu0 %v1309
        %1421 = vmatpush1.bf16.msra.mxu0 %v1308
        %1422 = vmatprep.subr.bf16.mxu0 %v1313
        %1423 = vmatpush1.bf16.msra.mxu0 %v1312
        %1424 = vmatprep.subr.bf16.mxu0 %v1317
        %1425 = vmatpush1.bf16.msra.mxu0 %v1316
        %1426 = vmatprep.subr.bf16.mxu0 %v1321
        %1427 = vmatpush1.bf16.msra.mxu0 %v1320
        %1428 = vmatprep.subr.bf16.mxu0 %v1325
        %1429 = vmatpush1.bf16.msra.mxu0 %v1324
        %1430 = vmatprep.subr.bf16.mxu0 %v1329
        %1431 = vmatpush1.bf16.msra.mxu0 %v1328
        %1432 = vmatprep.subr.bf16.mxu0 %v1333
        %1433 = vmatpush1.bf16.msra.mxu0 %v1332
        %1434 = vmatprep.subr.bf16.mxu0 %v1337
        %1435 = vmatpush1.bf16.msra.mxu0 %v1336
        %1436 = vmatprep.subr.bf16.mxu0 %v1341
        %1437 = vmatpush1.bf16.msra.mxu0 %v1340
        %1438 = vmatprep.subr.bf16.mxu0 %v1345
        %1439 = vmatpush1.bf16.msra.mxu0 %v1344
        %1440 = vmatprep.subr.bf16.mxu0 %v1349
        %1441 = vmatpush1.bf16.msra.mxu0 %v1348
        %1442 = vmatprep.subr.bf16.mxu0 %v1353
        %1443 = vmatpush1.bf16.msra.mxu0 %v1352
        %1444 = vmatprep.subr.bf16.mxu0 %v1412
        %1445 = vmatpush1.bf16.msra.mxu0 %v1409
        %1446 = vmatprep.subr.bf16.mxu0 0
        %1447 = vmatpush1.bf16.msra.mxu0 0
        %1448 = vmatprep.subr.bf16.mxu0 0
        %1449 = vmatpush1.bf16.msra.mxu0 0
        %1450 = vmatprep.subr.bf16.mxu0 0
        %1451 = vmatpush1.bf16.msra.mxu0 0
        %1452 = vmatprep.mubr.bf16.mxu0 %v593
        %1453 = vmatmul.mubr.bf16.gmra.mrb[0].mxu0 %v338
        %v1454 = vpop.f32.mrb[0].mxu0
        %v1455 = vadd.f32 %v1141, %v1454
        %v1456 = vpop.f32.mrb[0].mxu0
        %v1457 = vadd.f32 %v1145, %v1456
        %v1458 = vpop.f32.mrb[0].mxu0
        %v1459 = vpop.f32.mrb[0].mxu0
        %1460 = vdwg.mxu0
        %1461 = vmatprep.subr.bf16.mxu0 %v1311
        %1462 = vmatpush1.bf16.msra.mxu0 %v1310
        %1463 = vmatprep.subr.bf16.mxu0 %v1315
        %1464 = vmatpush1.bf16.msra.mxu0 %v1314
        %1465 = vmatprep.subr.bf16.mxu0 %v1319
        %1466 = vmatpush1.bf16.msra.mxu0 %v1318
        %1467 = vmatprep.subr.bf16.mxu0 %v1323
        %1468 = vmatpush1.bf16.msra.mxu0 %v1322
        %1469 = vmatprep.subr.bf16.mxu0 %v1327
        %1470 = vmatpush1.bf16.msra.mxu0 %v1326
        %1471 = vmatprep.subr.bf16.mxu0 %v1331
        %1472 = vmatpush1.bf16.msra.mxu0 %v1330
        %1473 = vmatprep.subr.bf16.mxu0 %v1335
        %1474 = vmatpush1.bf16.msra.mxu0 %v1334
        %1475 = vmatprep.subr.bf16.mxu0 %v1339
        %1476 = vmatpush1.bf16.msra.mxu0 %v1338
        %1477 = vmatprep.subr.bf16.mxu0 %v1343
        %1478 = vmatpush1.bf16.msra.mxu0 %v1342
        %1479 = vmatprep.subr.bf16.mxu0 %v1347
        %1480 = vmatpush1.bf16.msra.mxu0 %v1346
        %1481 = vmatprep.subr.bf16.mxu0 %v1351
        %1482 = vmatpush1.bf16.msra.mxu0 %v1350
        %1483 = vmatprep.subr.bf16.mxu0 %v1355
        %1484 = vmatpush1.bf16.msra.mxu0 %v1354
        %1485 = vmatprep.subr.bf16.mxu0 %v1418
        %1486 = vmatpush1.bf16.msra.mxu0 %v1415
        %1487 = vmatprep.subr.bf16.mxu0 0
        %1488 = vmatpush1.bf16.msra.mxu0 0
        %1489 = vmatprep.subr.bf16.mxu0 0
        %1490 = vmatpush1.bf16.msra.mxu0 0
        %1491 = vmatprep.subr.bf16.mxu0 0
        %1492 = vmatpush1.bf16.msra.mxu0 0
        %1493 = vmatprep.mubr.bf16.mxu0 %v593
        %1494 = vmatmul.mubr.bf16.gmra.mrb[0].mxu0 %v338
        %v1495 = vpop.f32.mrb[0].mxu0
        %v1496 = vadd.f32 %v1149, %v1495
        %v1497 = vpop.f32.mrb[0].mxu0
        %v1498 = vadd.f32 %v1153, %v1497
        %v1499 = vpop.f32.mrb[0].mxu0
        %v1500 = vpop.f32.mrb[0].mxu0
        %1501 = vdwg.mxu0
        %v1502 = vrot.slane %v643, 7
        %v1503 = vrot.slane %v645, 7
        %v1504 = vrot.slane %v684, 7
        %v1505 = vrot.slane %v686, 7
        %1507 = vset.pattern.permute.xlu0 0
        %1508 = vperm.xlu0 %1507, %v281
        %v1509 = vpop.permute.xlu0 %1508
        %v1511 = vmul.f32 %v1502, %v1509
        %v1512 = vmul.f32 %v1503, %v1509
        %v1513 = vmul.f32 %v1504, %v1509
        %v1514 = vmul.f32 %v1505, %v1509
        %v1515 = vadd.f32 %v1455, %v1511
        %v1516 = vadd.f32 %v1457, %v1512
        %v1517 = vadd.f32 %v1496, %v1513
        %v1518 = vadd.f32 %v1498, %v1514
        %v1519 = vrot.slane %v1089, 1
        %v1520 = vrot.slane %v1091, 1
        %v1521 = vrot.slane %v1130, 1
        %v1522 = vrot.slane %v1132, 1
        %1524 = vset.pattern.permute.xlu0 0
        %1525 = vperm.xlu0 %1524, %v283
        %v1526 = vpop.permute.xlu0 %1525
        %v1528 = vmul.f32 %v1519, %v1526
        %v1529 = vmul.f32 %v1520, %v1526
        %v1530 = vmul.f32 %v1521, %v1526
        %v1531 = vmul.f32 %v1522, %v1526
        %v1532 = vadd.f32 %v1515, %v1528
        %v1533 = vadd.f32 %v1516, %v1529
        %v1534 = vadd.f32 %v1517, %v1530
        %v1535 = vadd.f32 %v1518, %v1531
        %v1536 = vmax.f32 %v1532, 0.0
        %v1537 = vmax.f32 %v1533, 0.0
        %v1538 = vmax.f32 %v1534, 0.0
        %v1539 = vmax.f32 %v1535, 0.0
        %v1540 = vpack.c.bf16 %v1536, %v1536
        %v1541 = vpack.c.bf16 %v1537, %v1537
        %v1542 = vpack.c.bf16 %v1538, %v1538
        %v1543 = vpack.c.bf16 %v1539, %v1539
        %v1544 = vld [vmem:[#allocation5] sm:$0xf]
        %v1545 = vld [vmem:[#allocation5 + $0x4] sm:$0xf]
        %v1546 = vld [vmem:[#allocation5 + $0x8] sm:$0xf]
        %v1547 = vld [vmem:[#allocation5 + $0xc] sm:$0xf]
        %v1548 = vld [vmem:[#allocation5 + $0x10] sm:$0xf]
        %v1549 = vld [vmem:[#allocation5 + $0x14] sm:$0xf]
        %v1550 = vld [vmem:[#allocation5 + $0x18] sm:$0xf]
        %v1551 = vld [vmem:[#allocation5 + $0x1c] sm:$0xf]
        %v1552 = vld [vmem:[#allocation5 + $0x20] sm:$0xf]
        %v1553 = vld [vmem:[#allocation5 + $0x24] sm:$0xf]
        %v1554 = vld [vmem:[#allocation5 + $0x28] sm:$0xf]
        %v1555 = vld [vmem:[#allocation5 + $0x2c] sm:$0xf]
        %v1556 = vld [vmem:[#allocation5 + $0x30] sm:$0xf]
        %v1557 = vld [vmem:[#allocation5 + $0x34] sm:$0xf]
        %v1558 = vld [vmem:[#allocation5 + $0x38] sm:$0xf]
        %v1559 = vld [vmem:[#allocation5 + $0x3c] sm:$0xf]
        %v1560 = vld [vmem:[#allocation5 + $0x40] sm:$0xf]
        %v1561 = vld [vmem:[#allocation5 + $0x44] sm:$0xf]
        %v1562 = vld [vmem:[#allocation5 + $0x48] sm:$0xf]
        %v1563 = vld [vmem:[#allocation5 + $0x4c] sm:$0xf]
        %v1564 = vld [vmem:[#allocation5 + $0x50] sm:$0xf]
        %v1565 = vld [vmem:[#allocation5 + $0x54] sm:$0xf]
        %v1566 = vld [vmem:[#allocation5 + $0x58] sm:$0xf]
        %v1567 = vld [vmem:[#allocation5 + $0x5c] sm:$0xf]
        %v1568 = vld [vmem:[#allocation5 + $0x60] sm:$0xf]
        %v1569 = vld [vmem:[#allocation5 + $0x64] sm:$0xf]
        %v1570 = vld [vmem:[#allocation5 + $0x68] sm:$0xf]
        %v1571 = vld [vmem:[#allocation5 + $0x6c] sm:$0xf]
        %v1572 = vld [vmem:[#allocation5 + $0x70] sm:$0xf]
        %v1573 = vld [vmem:[#allocation5 + $0x74] sm:$0xf]
        %v1574 = vld [vmem:[#allocation5 + $0x78] sm:$0xf]
        %v1575 = vld [vmem:[#allocation5 + $0x7c] sm:$0xf]
        %v1576 = vld [vmem:[#allocation5 + $0x80] sm:$0xf]
        %v1577 = vld [vmem:[#allocation5 + $0x84] sm:$0xf]
        %v1578 = vld [vmem:[#allocation5 + $0x88] sm:$0xf]
        %v1579 = vld [vmem:[#allocation5 + $0x8c] sm:$0xf]
        %v1580 = vld [vmem:[#allocation5 + $0x90] sm:$0xf]
        %v1581 = vld [vmem:[#allocation5 + $0x94] sm:$0xf]
        %v1582 = vld [vmem:[#allocation5 + $0x98] sm:$0xf]
        %v1583 = vld [vmem:[#allocation5 + $0x9c] sm:$0xf]
        %v1584 = vld [vmem:[#allocation5 + $0xa0] sm:$0xf]
        %v1585 = vld [vmem:[#allocation5 + $0xa4] sm:$0xf]
        %v1586 = vld [vmem:[#allocation5 + $0xa8] sm:$0xf]
        %v1587 = vld [vmem:[#allocation5 + $0xac] sm:$0xf]
        %v1588 = vld [vmem:[#allocation5 + $0xb0] sm:$0xf]
        %v1589 = vld [vmem:[#allocation5 + $0xb4] sm:$0xf]
        %v1590 = vld [vmem:[#allocation5 + $0xb8] sm:$0xf]
        %v1591 = vld [vmem:[#allocation5 + $0xbc] sm:$0xf]
        %v1592 = vld [vmem:[#allocation5 + $0xc0] sm:$0xf]
        %v1593 = vld [vmem:[#allocation5 + $0xc4] sm:$0xf]
        %v1594 = vld [vmem:[#allocation5 + $0xc8] sm:$0xf]
        %v1595 = vld [vmem:[#allocation5 + $0xcc] sm:$0xf]
        %v1596 = vld [vmem:[#allocation5 + $0xd0] sm:$0xf]
        %v1597 = vld [vmem:[#allocation5 + $0xd4] sm:$0xf]
        %v1598 = vld [vmem:[#allocation5 + $0xd8] sm:$0xf]
        %v1599 = vld [vmem:[#allocation5 + $0xdc] sm:$0xf]
        %v1600 = vld [vmem:[#allocation5 + $0xe0] sm:$0xf]
        %v1601 = vld [vmem:[#allocation5 + $0xe4] sm:$0xf]
        %v1602 = vld [vmem:[#allocation5 + $0xe8] sm:$0xf]
        %v1603 = vld [vmem:[#allocation5 + $0xec] sm:$0xf]
        %v1604 = vld [vmem:[#allocation5 + $0xf0] sm:$0xf]
        %v1605 = vld [vmem:[#allocation5 + $0xf4] sm:$0xf]
        %v1606 = vld [vmem:[#allocation5 + $0xf8] sm:$0xf]
        %v1607 = vld [vmem:[#allocation5 + $0xfc] sm:$0xf]
        %v1672 = vunpack.c.l.b16 %v1544
        %v1673 = vunpack.c.l.b16 %v1545
        %v1674 = vunpack.c.l.b16 %v1546
        %v1675 = vunpack.c.l.b16 %v1547
        %v1676 = vunpack.c.l.b16 %v1548
        %v1677 = vunpack.c.l.b16 %v1549
        %v1678 = vunpack.c.l.b16 %v1550
        %v1679 = vunpack.c.l.b16 %v1551
        %v1680 = vunpack.c.l.b16 %v1552
        %v1681 = vunpack.c.l.b16 %v1553
        %v1682 = vunpack.c.l.b16 %v1554
        %v1683 = vunpack.c.l.b16 %v1555
        %v1684 = vunpack.c.l.b16 %v1556
        %v1685 = vunpack.c.l.b16 %v1557
        %v1686 = vunpack.c.l.b16 %v1558
        %v1687 = vunpack.c.l.b16 %v1559
        %v1688 = vunpack.c.l.b16 %v1560
        %v1689 = vunpack.c.l.b16 %v1561
        %v1690 = vunpack.c.l.b16 %v1562
        %v1691 = vunpack.c.l.b16 %v1563
        %v1692 = vunpack.c.l.b16 %v1564
        %v1693 = vunpack.c.l.b16 %v1565
        %v1694 = vunpack.c.l.b16 %v1566
        %v1695 = vunpack.c.l.b16 %v1567
        %v1696 = vunpack.c.l.b16 %v1568
        %v1697 = vunpack.c.l.b16 %v1569
        %v1698 = vunpack.c.l.b16 %v1570
        %v1699 = vunpack.c.l.b16 %v1571
        %v1700 = vunpack.c.l.b16 %v1572
        %v1701 = vunpack.c.l.b16 %v1573
        %v1702 = vunpack.c.l.b16 %v1574
        %v1703 = vunpack.c.l.b16 %v1575
        %v1704 = vunpack.c.l.b16 %v1576
        %v1705 = vunpack.c.l.b16 %v1577
        %v1706 = vunpack.c.l.b16 %v1578
        %v1707 = vunpack.c.l.b16 %v1579
        %v1708 = vunpack.c.l.b16 %v1580
        %v1709 = vunpack.c.l.b16 %v1581
        %v1710 = vunpack.c.l.b16 %v1582
        %v1711 = vunpack.c.l.b16 %v1583
        %v1712 = vunpack.c.l.b16 %v1584
        %v1713 = vunpack.c.l.b16 %v1585
        %v1714 = vunpack.c.l.b16 %v1586
        %v1715 = vunpack.c.l.b16 %v1587
        %v1716 = vunpack.c.l.b16 %v1588
        %v1717 = vunpack.c.l.b16 %v1589
        %v1718 = vunpack.c.l.b16 %v1590
        %v1719 = vunpack.c.l.b16 %v1591
        %v1720 = vunpack.c.l.b16 %v1592
        %v1721 = vunpack.c.l.b16 %v1593
        %v1722 = vunpack.c.l.b16 %v1594
        %v1723 = vunpack.c.l.b16 %v1595
        %v1724 = vunpack.c.l.b16 %v1596
        %v1725 = vunpack.c.l.b16 %v1597
        %v1726 = vunpack.c.l.b16 %v1598
        %v1727 = vunpack.c.l.b16 %v1599
        %v1728 = vunpack.c.l.b16 %v1600
        %v1729 = vunpack.c.l.b16 %v1601
        %v1730 = vunpack.c.l.b16 %v1602
        %v1731 = vunpack.c.l.b16 %v1603
        %v1732 = vunpack.c.l.b16 %v1604
        %v1733 = vunpack.c.l.b16 %v1605
        %v1734 = vunpack.c.l.b16 %v1606
        %v1735 = vunpack.c.l.b16 %v1607
        %v1736 = vpack.c.b16 %v1673, %v1672
        %v1737 = vpack.c.b16 %v1675, %v1674
        %v1738 = vpack.c.b16 %v1677, %v1676
        %v1739 = vpack.c.b16 %v1679, %v1678
        %v1740 = vpack.c.b16 %v1681, %v1680
        %v1741 = vpack.c.b16 %v1683, %v1682
        %v1742 = vpack.c.b16 %v1685, %v1684
        %v1743 = vpack.c.b16 %v1687, %v1686
        %v1744 = vpack.c.b16 %v1689, %v1688
        %v1745 = vpack.c.b16 %v1691, %v1690
        %v1746 = vpack.c.b16 %v1693, %v1692
        %v1747 = vpack.c.b16 %v1695, %v1694
        %v1748 = vpack.c.b16 %v1697, %v1696
        %v1749 = vpack.c.b16 %v1699, %v1698
        %v1750 = vpack.c.b16 %v1701, %v1700
        %v1751 = vpack.c.b16 %v1703, %v1702
        %v1752 = vpack.c.b16 %v1705, %v1704
        %v1753 = vpack.c.b16 %v1707, %v1706
        %v1754 = vpack.c.b16 %v1709, %v1708
        %v1755 = vpack.c.b16 %v1711, %v1710
        %v1756 = vpack.c.b16 %v1713, %v1712
        %v1757 = vpack.c.b16 %v1715, %v1714
        %v1758 = vpack.c.b16 %v1717, %v1716
        %v1759 = vpack.c.b16 %v1719, %v1718
        %v1760 = vpack.c.b16 %v1721, %v1720
        %v1761 = vpack.c.b16 %v1723, %v1722
        %v1762 = vpack.c.b16 %v1725, %v1724
        %v1763 = vpack.c.b16 %v1727, %v1726
        %v1764 = vpack.c.b16 %v1729, %v1728
        %v1765 = vpack.c.b16 %v1731, %v1730
        %v1766 = vpack.c.b16 %v1733, %v1732
        %v1767 = vpack.c.b16 %v1735, %v1734
        %1800 = vmatprep.subr.bf16.mxu0 0
        %1801 = vmatpush1.bf16.msra.mxu0 %v1736
        %1802 = vmatprep.subr.bf16.mxu0 0
        %1803 = vmatpush1.bf16.msra.mxu0 %v1737
        %1804 = vmatprep.subr.bf16.mxu0 0
        %1805 = vmatpush1.bf16.msra.mxu0 %v1738
        %1806 = vmatprep.subr.bf16.mxu0 0
        %1807 = vmatpush1.bf16.msra.mxu0 %v1739
        %1808 = vmatprep.subr.bf16.mxu0 0
        %1809 = vmatpush1.bf16.msra.mxu0 %v1740
        %1810 = vmatprep.subr.bf16.mxu0 0
        %1811 = vmatpush1.bf16.msra.mxu0 %v1741
        %1812 = vmatprep.subr.bf16.mxu0 0
        %1813 = vmatpush1.bf16.msra.mxu0 %v1742
        %1814 = vmatprep.subr.bf16.mxu0 0
        %1815 = vmatpush1.bf16.msra.mxu0 %v1743
        %1816 = vmatprep.subr.bf16.mxu0 0
        %1817 = vmatpush1.bf16.msra.mxu0 %v1744
        %1818 = vmatprep.subr.bf16.mxu0 0
        %1819 = vmatpush1.bf16.msra.mxu0 %v1745
        %1820 = vmatprep.subr.bf16.mxu0 0
        %1821 = vmatpush1.bf16.msra.mxu0 %v1746
        %1822 = vmatprep.subr.bf16.mxu0 0
        %1823 = vmatpush1.bf16.msra.mxu0 %v1747
        %1824 = vmatprep.subr.bf16.mxu0 0
        %1825 = vmatpush1.bf16.msra.mxu0 %v1748
        %1826 = vmatprep.subr.bf16.mxu0 0
        %1827 = vmatpush1.bf16.msra.mxu0 %v1749
        %1828 = vmatprep.subr.bf16.mxu0 0
        %1829 = vmatpush1.bf16.msra.mxu0 %v1750
        %1830 = vmatprep.subr.bf16.mxu0 0
        %1831 = vmatpush1.bf16.msra.mxu0 %v1751
        %1832 = vmatprep.mubr.bf16.mxu0 %v1541
        %1833 = vmatmul.mubr.bf16.gmra.mrb[0].mxu0 %v1540
        %v1834 = vpop.f32.mrb[0].mxu0
        %v1835 = vadd.f32 0.0, %v1834
        %v1836 = vpop.f32.mrb[0].mxu0
        %v1837 = vpop.f32.mrb[0].mxu0
        %v1838 = vpop.f32.mrb[0].mxu0
        %1839 = vdwg.mxu0
        %1840 = vmatprep.subr.bf16.mxu0 0
        %1841 = vmatpush1.bf16.msra.mxu0 %v1752
        %1842 = vmatprep.subr.bf16.mxu0 0
        %1843 = vmatpush1.bf16.msra.mxu0 %v1753
        %1844 = vmatprep.subr.bf16.mxu0 0
        %1845 = vmatpush1.bf16.msra.mxu0 %v1754
        %1846 = vmatprep.subr.bf16.mxu0 0
        %1847 = vmatpush1.bf16.msra.mxu0 %v1755
        %1848 = vmatprep.subr.bf16.mxu0 0
        %1849 = vmatpush1.bf16.msra.mxu0 %v1756
        %1850 = vmatprep.subr.bf16.mxu0 0
        %1851 = vmatpush1.bf16.msra.mxu0 %v1757
        %1852 = vmatprep.subr.bf16.mxu0 0
        %1853 = vmatpush1.bf16.msra.mxu0 %v1758
        %1854 = vmatprep.subr.bf16.mxu0 0
        %1855 = vmatpush1.bf16.msra.mxu0 %v1759
        %1856 = vmatprep.subr.bf16.mxu0 0
        %1857 = vmatpush1.bf16.msra.mxu0 %v1760
        %1858 = vmatprep.subr.bf16.mxu0 0
        %1859 = vmatpush1.bf16.msra.mxu0 %v1761
        %1860 = vmatprep.subr.bf16.mxu0 0
        %1861 = vmatpush1.bf16.msra.mxu0 %v1762
        %1862 = vmatprep.subr.bf16.mxu0 0
        %1863 = vmatpush1.bf16.msra.mxu0 %v1763
        %1864 = vmatprep.subr.bf16.mxu0 0
        %1865 = vmatpush1.bf16.msra.mxu0 %v1764
        %1866 = vmatprep.subr.bf16.mxu0 0
        %1867 = vmatpush1.bf16.msra.mxu0 %v1765
        %1868 = vmatprep.subr.bf16.mxu0 0
        %1869 = vmatpush1.bf16.msra.mxu0 %v1766
        %1870 = vmatprep.subr.bf16.mxu0 0
        %1871 = vmatpush1.bf16.msra.mxu0 %v1767
        %1872 = vmatprep.mubr.bf16.mxu0 %v1543
        %1873 = vmatmul.mubr.bf16.gmra.mrb[0].mxu0 %v1542
        %v1874 = vpop.f32.mrb[0].mxu0
        %v1875 = vadd.f32 %v1835, %v1874
        %v1876 = vpop.f32.mrb[0].mxu0
        %v1877 = vpop.f32.mrb[0].mxu0
        %v1878 = vpop.f32.mrb[0].mxu0
        %1879 = vdwg.mxu0
        %s1880 = scalar_lea.vmem [#allocation5], 256
        %v1881 = vld [vmem:[%s1880] sm:$0xf]
        %v1882 = vld [vmem:[%s1880 + $0x4] sm:$0xf]
        %v1883 = vld [vmem:[%s1880 + $0x8] sm:$0xf]
        %v1884 = vld [vmem:[%s1880 + $0xc] sm:$0xf]
        %v1885 = vld [vmem:[%s1880 + $0x10] sm:$0xf]
        %v1886 = vld [vmem:[%s1880 + $0x14] sm:$0xf]
        %v1887 = vld [vmem:[%s1880 + $0x18] sm:$0xf]
        %v1888 = vld [vmem:[%s1880 + $0x1c] sm:$0xf]
        %v1889 = vld [vmem:[%s1880 + $0x20] sm:$0xf]
        %v1890 = vld [vmem:[%s1880 + $0x24] sm:$0xf]
        %v1891 = vld [vmem:[%s1880 + $0x28] sm:$0xf]
        %v1892 = vld [vmem:[%s1880 + $0x2c] sm:$0xf]
        %v1893 = vld [vmem:[%s1880 + $0x30] sm:$0xf]
        %v1894 = vld [vmem:[%s1880 + $0x34] sm:$0xf]
        %v1895 = vld [vmem:[%s1880 + $0x38] sm:$0xf]
        %v1896 = vld [vmem:[%s1880 + $0x3c] sm:$0xf]
        %v1897 = vld [vmem:[%s1880 + $0x40] sm:$0xf]
        %v1898 = vld [vmem:[%s1880 + $0x44] sm:$0xf]
        %v1899 = vld [vmem:[%s1880 + $0x48] sm:$0xf]
        %v1900 = vld [vmem:[%s1880 + $0x4c] sm:$0xf]
        %v1901 = vld [vmem:[%s1880 + $0x50] sm:$0xf]
        %v1902 = vld [vmem:[%s1880 + $0x54] sm:$0xf]
        %v1903 = vld [vmem:[%s1880 + $0x58] sm:$0xf]
        %v1904 = vld [vmem:[%s1880 + $0x5c] sm:$0xf]
        %v1905 = vld [vmem:[%s1880 + $0x60] sm:$0xf]
        %v1906 = vld [vmem:[%s1880 + $0x64] sm:$0xf]
        %v1907 = vld [vmem:[%s1880 + $0x68] sm:$0xf]
        %v1908 = vld [vmem:[%s1880 + $0x6c] sm:$0xf]
        %v1909 = vld [vmem:[%s1880 + $0x70] sm:$0xf]
        %v1910 = vld [vmem:[%s1880 + $0x74] sm:$0xf]
        %v1911 = vld [vmem:[%s1880 + $0x78] sm:$0xf]
        %v1912 = vld [vmem:[%s1880 + $0x7c] sm:$0xf]
        %v1913 = vld [vmem:[%s1880 + $0x80] sm:$0xf]
        %v1914 = vld [vmem:[%s1880 + $0x84] sm:$0xf]
        %v1915 = vld [vmem:[%s1880 + $0x88] sm:$0xf]
        %v1916 = vld [vmem:[%s1880 + $0x8c] sm:$0xf]
        %v1917 = vld [vmem:[%s1880 + $0x90] sm:$0xf]
        %v1918 = vld [vmem:[%s1880 + $0x94] sm:$0xf]
        %v1919 = vld [vmem:[%s1880 + $0x98] sm:$0xf]
        %v1920 = vld [vmem:[%s1880 + $0x9c] sm:$0xf]
        %v1921 = vld [vmem:[%s1880 + $0xa0] sm:$0xf]
        %v1922 = vld [vmem:[%s1880 + $0xa4] sm:$0xf]
        %v1923 = vld [vmem:[%s1880 + $0xa8] sm:$0xf]
        %v1924 = vld [vmem:[%s1880 + $0xac] sm:$0xf]
        %v1925 = vld [vmem:[%s1880 + $0xb0] sm:$0xf]
        %v1926 = vld [vmem:[%s1880 + $0xb4] sm:$0xf]
        %v1927 = vld [vmem:[%s1880 + $0xb8] sm:$0xf]
        %v1928 = vld [vmem:[%s1880 + $0xbc] sm:$0xf]
        %v1929 = vld [vmem:[%s1880 + $0xc0] sm:$0xf]
        %v1930 = vld [vmem:[%s1880 + $0xc4] sm:$0xf]
        %v1931 = vld [vmem:[%s1880 + $0xc8] sm:$0xf]
        %v1932 = vld [vmem:[%s1880 + $0xcc] sm:$0xf]
        %v1933 = vld [vmem:[%s1880 + $0xd0] sm:$0xf]
        %v1934 = vld [vmem:[%s1880 + $0xd4] sm:$0xf]
        %v1935 = vld [vmem:[%s1880 + $0xd8] sm:$0xf]
        %v1936 = vld [vmem:[%s1880 + $0xdc] sm:$0xf]
        %v1937 = vld [vmem:[%s1880 + $0xe0] sm:$0xf]
        %v1938 = vld [vmem:[%s1880 + $0xe4] sm:$0xf]
        %v1939 = vld [vmem:[%s1880 + $0xe8] sm:$0xf]
        %v1940 = vld [vmem:[%s1880 + $0xec] sm:$0xf]
        %v1941 = vld [vmem:[%s1880 + $0xf0] sm:$0xf]
        %v1942 = vld [vmem:[%s1880 + $0xf4] sm:$0xf]
        %v1943 = vld [vmem:[%s1880 + $0xf8] sm:$0xf]
        %v1944 = vld [vmem:[%s1880 + $0xfc] sm:$0xf]
        %s1945 = scalar_lea.vmem [#allocation5], 512
        %v1946 = vld [vmem:[%s1945] sm:$0xf]
        %v1947 = vld [vmem:[%s1945 + $0x4] sm:$0xf]
        %v1948 = vld [vmem:[%s1945 + $0x8] sm:$0xf]
        %v1949 = vld [vmem:[%s1945 + $0xc] sm:$0xf]
        %v1950 = vld [vmem:[%s1945 + $0x10] sm:$0xf]
        %v1951 = vld [vmem:[%s1945 + $0x14] sm:$0xf]
        %v1952 = vld [vmem:[%s1945 + $0x18] sm:$0xf]
        %v1953 = vld [vmem:[%s1945 + $0x1c] sm:$0xf]
        %v1954 = vld [vmem:[%s1945 + $0x20] sm:$0xf]
        %v1955 = vld [vmem:[%s1945 + $0x24] sm:$0xf]
        %v1956 = vld [vmem:[%s1945 + $0x28] sm:$0xf]
        %v1957 = vld [vmem:[%s1945 + $0x2c] sm:$0xf]
        %v1958 = vld [vmem:[%s1945 + $0x30] sm:$0xf]
        %v1959 = vld [vmem:[%s1945 + $0x34] sm:$0xf]
        %v1960 = vld [vmem:[%s1945 + $0x38] sm:$0xf]
        %v1961 = vld [vmem:[%s1945 + $0x3c] sm:$0xf]
        %v1962 = vld [vmem:[%s1945 + $0x40] sm:$0xf]
        %v1963 = vld [vmem:[%s1945 + $0x44] sm:$0xf]
        %v1964 = vld [vmem:[%s1945 + $0x48] sm:$0xf]
        %v1965 = vld [vmem:[%s1945 + $0x4c] sm:$0xf]
        %v1966 = vld [vmem:[%s1945 + $0x50] sm:$0xf]
        %v1967 = vld [vmem:[%s1945 + $0x54] sm:$0xf]
        %v1968 = vld [vmem:[%s1945 + $0x58] sm:$0xf]
        %v1969 = vld [vmem:[%s1945 + $0x5c] sm:$0xf]
        %v1970 = vld [vmem:[%s1945 + $0x60] sm:$0xf]
        %v1971 = vld [vmem:[%s1945 + $0x64] sm:$0xf]
        %v1972 = vld [vmem:[%s1945 + $0x68] sm:$0xf]
        %v1973 = vld [vmem:[%s1945 + $0x6c] sm:$0xf]
        %v1974 = vld [vmem:[%s1945 + $0x70] sm:$0xf]
        %v1975 = vld [vmem:[%s1945 + $0x74] sm:$0xf]
        %v1976 = vld [vmem:[%s1945 + $0x78] sm:$0xf]
        %v1977 = vld [vmem:[%s1945 + $0x7c] sm:$0xf]
        %v1978 = vld [vmem:[%s1945 + $0x80] sm:$0xf]
        %v1979 = vld [vmem:[%s1945 + $0x84] sm:$0xf]
        %v1980 = vld [vmem:[%s1945 + $0x88] sm:$0xf]
        %v1981 = vld [vmem:[%s1945 + $0x8c] sm:$0xf]
        %v1982 = vld [vmem:[%s1945 + $0x90] sm:$0xf]
        %v1983 = vld [vmem:[%s1945 + $0x94] sm:$0xf]
        %v1984 = vld [vmem:[%s1945 + $0x98] sm:$0xf]
        %v1985 = vld [vmem:[%s1945 + $0x9c] sm:$0xf]
        %v1986 = vld [vmem:[%s1945 + $0xa0] sm:$0xf]
        %v1987 = vld [vmem:[%s1945 + $0xa4] sm:$0xf]
        %v1988 = vld [vmem:[%s1945 + $0xa8] sm:$0xf]
        %v1989 = vld [vmem:[%s1945 + $0xac] sm:$0xf]
        %v1990 = vld [vmem:[%s1945 + $0xb0] sm:$0xf]
        %v1991 = vld [vmem:[%s1945 + $0xb4] sm:$0xf]
        %v1992 = vld [vmem:[%s1945 + $0xb8] sm:$0xf]
        %v1993 = vld [vmem:[%s1945 + $0xbc] sm:$0xf]
        %v1994 = vld [vmem:[%s1945 + $0xc0] sm:$0xf]
        %v1995 = vld [vmem:[%s1945 + $0xc4] sm:$0xf]
        %v1996 = vld [vmem:[%s1945 + $0xc8] sm:$0xf]
        %v1997 = vld [vmem:[%s1945 + $0xcc] sm:$0xf]
        %v1998 = vld [vmem:[%s1945 + $0xd0] sm:$0xf]
        %v1999 = vld [vmem:[%s1945 + $0xd4] sm:$0xf]
        %v2000 = vld [vmem:[%s1945 + $0xd8] sm:$0xf]
        %v2001 = vld [vmem:[%s1945 + $0xdc] sm:$0xf]
        %v2002 = vld [vmem:[%s1945 + $0xe0] sm:$0xf]
        %v2003 = vld [vmem:[%s1945 + $0xe4] sm:$0xf]
        %v2004 = vld [vmem:[%s1945 + $0xe8] sm:$0xf]
        %v2005 = vld [vmem:[%s1945 + $0xec] sm:$0xf]
        %v2006 = vld [vmem:[%s1945 + $0xf0] sm:$0xf]
        %v2007 = vld [vmem:[%s1945 + $0xf4] sm:$0xf]
        %v2008 = vld [vmem:[%s1945 + $0xf8] sm:$0xf]
        %v2009 = vld [vmem:[%s1945 + $0xfc] sm:$0xf]
        %v2074 = vunpack.c.l.b16 %v1946
        %v2075 = vunpack.c.l.b16 %v1947
        %v2076 = vunpack.c.l.b16 %v1948
        %v2077 = vunpack.c.l.b16 %v1949
        %v2078 = vunpack.c.l.b16 %v1950
        %v2079 = vunpack.c.l.b16 %v1951
        %v2080 = vunpack.c.l.b16 %v1952
        %v2081 = vunpack.c.l.b16 %v1953
        %v2082 = vunpack.c.l.b16 %v1954
        %v2083 = vunpack.c.l.b16 %v1955
        %v2084 = vunpack.c.l.b16 %v1956
        %v2085 = vunpack.c.l.b16 %v1957
        %v2086 = vunpack.c.l.b16 %v1958
        %v2087 = vunpack.c.l.b16 %v1959
        %v2088 = vunpack.c.l.b16 %v1960
        %v2089 = vunpack.c.l.b16 %v1961
        %v2090 = vunpack.c.l.b16 %v1962
        %v2091 = vunpack.c.l.b16 %v1963
        %v2092 = vunpack.c.l.b16 %v1964
        %v2093 = vunpack.c.l.b16 %v1965
        %v2094 = vunpack.c.l.b16 %v1966
        %v2095 = vunpack.c.l.b16 %v1967
        %v2096 = vunpack.c.l.b16 %v1968
        %v2097 = vunpack.c.l.b16 %v1969
        %v2098 = vunpack.c.l.b16 %v1970
        %v2099 = vunpack.c.l.b16 %v1971
        %v2100 = vunpack.c.l.b16 %v1972
        %v2101 = vunpack.c.l.b16 %v1973
        %v2102 = vunpack.c.l.b16 %v1974
        %v2103 = vunpack.c.l.b16 %v1975
        %v2104 = vunpack.c.l.b16 %v1976
        %v2105 = vunpack.c.l.b16 %v1977
        %v2106 = vunpack.c.l.b16 %v1978
        %v2107 = vunpack.c.l.b16 %v1979
        %v2108 = vunpack.c.l.b16 %v1980
        %v2109 = vunpack.c.l.b16 %v1981
        %v2110 = vunpack.c.l.b16 %v1982
        %v2111 = vunpack.c.l.b16 %v1983
        %v2112 = vunpack.c.l.b16 %v1984
        %v2113 = vunpack.c.l.b16 %v1985
        %v2114 = vunpack.c.l.b16 %v1986
        %v2115 = vunpack.c.l.b16 %v1987
        %v2116 = vunpack.c.l.b16 %v1988
        %v2117 = vunpack.c.l.b16 %v1989
        %v2118 = vunpack.c.l.b16 %v1990
        %v2119 = vunpack.c.l.b16 %v1991
        %v2120 = vunpack.c.l.b16 %v1992
        %v2121 = vunpack.c.l.b16 %v1993
        %v2122 = vunpack.c.l.b16 %v1994
        %v2123 = vunpack.c.l.b16 %v1995
        %v2124 = vunpack.c.l.b16 %v1996
        %v2125 = vunpack.c.l.b16 %v1997
        %v2126 = vunpack.c.l.b16 %v1998
        %v2127 = vunpack.c.l.b16 %v1999
        %v2128 = vunpack.c.l.b16 %v2000
        %v2129 = vunpack.c.l.b16 %v2001
        %v2130 = vunpack.c.l.b16 %v2002
        %v2131 = vunpack.c.l.b16 %v2003
        %v2132 = vunpack.c.l.b16 %v2004
        %v2133 = vunpack.c.l.b16 %v2005
        %v2134 = vunpack.c.l.b16 %v2006
        %v2135 = vunpack.c.l.b16 %v2007
        %v2136 = vunpack.c.l.b16 %v2008
        %v2137 = vunpack.c.l.b16 %v2009
        %v2138 = vpack.c.b16 %v2075, %v2074
        %v2139 = vpack.c.b16 %v2077, %v2076
        %v2140 = vpack.c.b16 %v2079, %v2078
        %v2141 = vpack.c.b16 %v2081, %v2080
        %v2142 = vpack.c.b16 %v2083, %v2082
        %v2143 = vpack.c.b16 %v2085, %v2084
        %v2144 = vpack.c.b16 %v2087, %v2086
        %v2145 = vpack.c.b16 %v2089, %v2088
        %v2146 = vpack.c.b16 %v2091, %v2090
        %v2147 = vpack.c.b16 %v2093, %v2092
        %v2148 = vpack.c.b16 %v2095, %v2094
        %v2149 = vpack.c.b16 %v2097, %v2096
        %v2150 = vpack.c.b16 %v2099, %v2098
        %v2151 = vpack.c.b16 %v2101, %v2100
        %v2152 = vpack.c.b16 %v2103, %v2102
        %v2153 = vpack.c.b16 %v2105, %v2104
        %v2154 = vpack.c.b16 %v2107, %v2106
        %v2155 = vpack.c.b16 %v2109, %v2108
        %v2156 = vpack.c.b16 %v2111, %v2110
        %v2157 = vpack.c.b16 %v2113, %v2112
        %v2158 = vpack.c.b16 %v2115, %v2114
        %v2159 = vpack.c.b16 %v2117, %v2116
        %v2160 = vpack.c.b16 %v2119, %v2118
        %v2161 = vpack.c.b16 %v2121, %v2120
        %v2162 = vpack.c.b16 %v2123, %v2122
        %v2163 = vpack.c.b16 %v2125, %v2124
        %v2164 = vpack.c.b16 %v2127, %v2126
        %v2165 = vpack.c.b16 %v2129, %v2128
        %v2166 = vpack.c.b16 %v2131, %v2130
        %v2167 = vpack.c.b16 %v2133, %v2132
        %v2168 = vpack.c.b16 %v2135, %v2134
        %v2169 = vpack.c.b16 %v2137, %v2136
        %2202 = vmatprep.subr.bf16.mxu0 0
        %2203 = vmatpush1.bf16.msra.mxu0 %v2138
        %2204 = vmatprep.subr.bf16.mxu0 0
        %2205 = vmatpush1.bf16.msra.mxu0 %v2139
        %2206 = vmatprep.subr.bf16.mxu0 0
        %2207 = vmatpush1.bf16.msra.mxu0 %v2140
        %2208 = vmatprep.subr.bf16.mxu0 0
        %2209 = vmatpush1.bf16.msra.mxu0 %v2141
        %2210 = vmatprep.subr.bf16.mxu0 0
        %2211 = vmatpush1.bf16.msra.mxu0 %v2142
        %2212 = vmatprep.subr.bf16.mxu0 0
        %2213 = vmatpush1.bf16.msra.mxu0 %v2143
        %2214 = vmatprep.subr.bf16.mxu0 0
        %2215 = vmatpush1.bf16.msra.mxu0 %v2144
        %2216 = vmatprep.subr.bf16.mxu0 0
        %2217 = vmatpush1.bf16.msra.mxu0 %v2145
        %2218 = vmatprep.subr.bf16.mxu0 0
        %2219 = vmatpush1.bf16.msra.mxu0 %v2146
        %2220 = vmatprep.subr.bf16.mxu0 0
        %2221 = vmatpush1.bf16.msra.mxu0 %v2147
        %2222 = vmatprep.subr.bf16.mxu0 0
        %2223 = vmatpush1.bf16.msra.mxu0 %v2148
        %2224 = vmatprep.subr.bf16.mxu0 0
        %2225 = vmatpush1.bf16.msra.mxu0 %v2149
        %2226 = vmatprep.subr.bf16.mxu0 0
        %2227 = vmatpush1.bf16.msra.mxu0 %v2150
        %2228 = vmatprep.subr.bf16.mxu0 0
        %2229 = vmatpush1.bf16.msra.mxu0 %v2151
        %2230 = vmatprep.subr.bf16.mxu0 0
        %2231 = vmatpush1.bf16.msra.mxu0 %v2152
        %2232 = vmatprep.subr.bf16.mxu0 0
        %2233 = vmatpush1.bf16.msra.mxu0 %v2153
        %2234 = vmatprep.mubr.bf16.mxu0 %v1541
        %2235 = vmatmul.mubr.bf16.gmra.mrb[0].mxu0 %v1540
        %v2236 = vpop.f32.mrb[0].mxu0
        %v2237 = vadd.f32 0.0, %v2236
        %v2238 = vpop.f32.mrb[0].mxu0
        %v2239 = vpop.f32.mrb[0].mxu0
        %v2240 = vpop.f32.mrb[0].mxu0
        %2241 = vdwg.mxu0
        %2242 = vmatprep.subr.bf16.mxu0 0
        %2243 = vmatpush1.bf16.msra.mxu0 %v2154
        %2244 = vmatprep.subr.bf16.mxu0 0
        %2245 = vmatpush1.bf16.msra.mxu0 %v2155
        %2246 = vmatprep.subr.bf16.mxu0 0
        %2247 = vmatpush1.bf16.msra.mxu0 %v2156
        %2248 = vmatprep.subr.bf16.mxu0 0
        %2249 = vmatpush1.bf16.msra.mxu0 %v2157
        %2250 = vmatprep.subr.bf16.mxu0 0
        %2251 = vmatpush1.bf16.msra.mxu0 %v2158
        %2252 = vmatprep.subr.bf16.mxu0 0
        %2253 = vmatpush1.bf16.msra.mxu0 %v2159
        %2254 = vmatprep.subr.bf16.mxu0 0
        %2255 = vmatpush1.bf16.msra.mxu0 %v2160
        %2256 = vmatprep.subr.bf16.mxu0 0
        %2257 = vmatpush1.bf16.msra.mxu0 %v2161
        %2258 = vmatprep.subr.bf16.mxu0 0
        %2259 = vmatpush1.bf16.msra.mxu0 %v2162
        %2260 = vmatprep.subr.bf16.mxu0 0
        %2261 = vmatpush1.bf16.msra.mxu0 %v2163
        %2262 = vmatprep.subr.bf16.mxu0 0
        %2263 = vmatpush1.bf16.msra.mxu0 %v2164
        %2264 = vmatprep.subr.bf16.mxu0 0
        %2265 = vmatpush1.bf16.msra.mxu0 %v2165
        %2266 = vmatprep.subr.bf16.mxu0 0
        %2267 = vmatpush1.bf16.msra.mxu0 %v2166
        %2268 = vmatprep.subr.bf16.mxu0 0
        %2269 = vmatpush1.bf16.msra.mxu0 %v2167
        %2270 = vmatprep.subr.bf16.mxu0 0
        %2271 = vmatpush1.bf16.msra.mxu0 %v2168
        %2272 = vmatprep.subr.bf16.mxu0 0
        %2273 = vmatpush1.bf16.msra.mxu0 %v2169
        %2274 = vmatprep.mubr.bf16.mxu0 %v1543
        %2275 = vmatmul.mubr.bf16.gmra.mrb[0].mxu0 %v1542
        %v2276 = vpop.f32.mrb[0].mxu0
        %v2277 = vadd.f32 %v2237, %v2276
        %v2278 = vpop.f32.mrb[0].mxu0
        %v2279 = vpop.f32.mrb[0].mxu0
        %v2280 = vpop.f32.mrb[0].mxu0
        %2281 = vdwg.mxu0
        %v2282 = vld [vmem:[%s4] sm:$0x1]
        %v2284 = vlaneseq
        %v2285 = vshrl.u32 %v2284, 7
        %v2286 = vsub.s32 0, %v2285
        %v2287 = vrot.slane %v2282, %v2286
        %v2353 = vunpack.c.l.b16 %v1881
        %v2354 = vunpack.c.l.b16 %v1882
        %v2355 = vunpack.c.l.b16 %v1883
        %v2356 = vunpack.c.l.b16 %v1884
        %v2357 = vunpack.c.l.b16 %v1885
        %v2358 = vunpack.c.l.b16 %v1886
        %v2359 = vunpack.c.l.b16 %v1887
        %v2360 = vunpack.c.l.b16 %v1888
        %v2361 = vunpack.c.l.b16 %v1889
        %v2362 = vunpack.c.l.b16 %v1890
        %v2363 = vunpack.c.l.b16 %v1891
        %v2364 = vunpack.c.l.b16 %v1892
        %v2365 = vunpack.c.l.b16 %v1893
        %v2366 = vunpack.c.l.b16 %v1894
        %v2367 = vunpack.c.l.b16 %v1895
        %v2368 = vunpack.c.l.b16 %v1896
        %v2369 = vunpack.c.l.b16 %v1897
        %v2370 = vunpack.c.l.b16 %v1898
        %v2371 = vunpack.c.l.b16 %v1899
        %v2372 = vunpack.c.l.b16 %v1900
        %v2373 = vunpack.c.l.b16 %v1901
        %v2374 = vunpack.c.l.b16 %v1902
        %v2375 = vunpack.c.l.b16 %v1903
        %v2376 = vunpack.c.l.b16 %v1904
        %v2377 = vunpack.c.l.b16 %v1905
        %v2378 = vunpack.c.l.b16 %v1906
        %v2379 = vunpack.c.l.b16 %v1907
        %v2380 = vunpack.c.l.b16 %v1908
        %v2381 = vunpack.c.l.b16 %v1909
        %v2382 = vunpack.c.l.b16 %v1910
        %v2383 = vunpack.c.l.b16 %v1911
        %v2384 = vunpack.c.l.b16 %v1912
        %v2385 = vunpack.c.l.b16 %v1913
        %v2386 = vunpack.c.l.b16 %v1914
        %v2387 = vunpack.c.l.b16 %v1915
        %v2388 = vunpack.c.l.b16 %v1916
        %v2389 = vunpack.c.l.b16 %v1917
        %v2390 = vunpack.c.l.b16 %v1918
        %v2391 = vunpack.c.l.b16 %v1919
        %v2392 = vunpack.c.l.b16 %v1920
        %v2393 = vunpack.c.l.b16 %v1921
        %v2394 = vunpack.c.l.b16 %v1922
        %v2395 = vunpack.c.l.b16 %v1923
        %v2396 = vunpack.c.l.b16 %v1924
        %v2397 = vunpack.c.l.b16 %v1925
        %v2398 = vunpack.c.l.b16 %v1926
        %v2399 = vunpack.c.l.b16 %v1927
        %v2400 = vunpack.c.l.b16 %v1928
        %v2401 = vunpack.c.l.b16 %v1929
        %v2402 = vunpack.c.l.b16 %v1930
        %v2403 = vunpack.c.l.b16 %v1931
        %v2404 = vunpack.c.l.b16 %v1932
        %v2405 = vunpack.c.l.b16 %v1933
        %v2406 = vunpack.c.l.b16 %v1934
        %v2407 = vunpack.c.l.b16 %v1935
        %v2408 = vunpack.c.l.b16 %v1936
        %v2409 = vunpack.c.l.b16 %v1937
        %v2410 = vunpack.c.l.b16 %v1938
        %v2411 = vunpack.c.l.b16 %v1939
        %v2412 = vunpack.c.l.b16 %v1940
        %v2413 = vunpack.c.l.b16 %v1941
        %v2414 = vunpack.c.l.b16 %v1942
        %v2415 = vunpack.c.l.b16 %v1943
        %v2416 = vunpack.c.l.b16 %v1944
        %v2417 = vpack.c.b16 %v2354, %v2353
        %v2418 = vpack.c.b16 %v2356, %v2355
        %v2419 = vpack.c.b16 %v2358, %v2357
        %v2420 = vpack.c.b16 %v2360, %v2359
        %v2421 = vpack.c.b16 %v2362, %v2361
        %v2422 = vpack.c.b16 %v2364, %v2363
        %v2423 = vpack.c.b16 %v2366, %v2365
        %v2424 = vpack.c.b16 %v2368, %v2367
        %v2425 = vpack.c.b16 %v2370, %v2369
        %v2426 = vpack.c.b16 %v2372, %v2371
        %v2427 = vpack.c.b16 %v2374, %v2373
        %v2428 = vpack.c.b16 %v2376, %v2375
        %v2429 = vpack.c.b16 %v2378, %v2377
        %v2430 = vpack.c.b16 %v2380, %v2379
        %v2431 = vpack.c.b16 %v2382, %v2381
        %v2432 = vpack.c.b16 %v2384, %v2383
        %v2433 = vpack.c.b16 %v2386, %v2385
        %v2434 = vpack.c.b16 %v2388, %v2387
        %v2435 = vpack.c.b16 %v2390, %v2389
        %v2436 = vpack.c.b16 %v2392, %v2391
        %v2437 = vpack.c.b16 %v2394, %v2393
        %v2438 = vpack.c.b16 %v2396, %v2395
        %v2439 = vpack.c.b16 %v2398, %v2397
        %v2440 = vpack.c.b16 %v2400, %v2399
        %v2441 = vpack.c.b16 %v2402, %v2401
        %v2442 = vpack.c.b16 %v2404, %v2403
        %v2443 = vpack.c.b16 %v2406, %v2405
        %v2444 = vpack.c.b16 %v2408, %v2407
        %v2445 = vpack.c.b16 %v2410, %v2409
        %v2446 = vpack.c.b16 %v2412, %v2411
        %v2447 = vpack.c.b16 %v2414, %v2413
        %v2448 = vpack.c.b16 %v2416, %v2415
        %2481 = vmatprep.subr.bf16.mxu0 0
        %2482 = vmatpush1.bf16.msra.mxu0 %v2417
        %2483 = vmatprep.subr.bf16.mxu0 0
        %2484 = vmatpush1.bf16.msra.mxu0 %v2418
        %2485 = vmatprep.subr.bf16.mxu0 0
        %2486 = vmatpush1.bf16.msra.mxu0 %v2419
        %2487 = vmatprep.subr.bf16.mxu0 0
        %2488 = vmatpush1.bf16.msra.mxu0 %v2420
        %2489 = vmatprep.subr.bf16.mxu0 0
        %2490 = vmatpush1.bf16.msra.mxu0 %v2421
        %2491 = vmatprep.subr.bf16.mxu0 0
        %2492 = vmatpush1.bf16.msra.mxu0 %v2422
        %2493 = vmatprep.subr.bf16.mxu0 0
        %2494 = vmatpush1.bf16.msra.mxu0 %v2423
        %2495 = vmatprep.subr.bf16.mxu0 0
        %2496 = vmatpush1.bf16.msra.mxu0 %v2424
        %2497 = vmatprep.subr.bf16.mxu0 0
        %2498 = vmatpush1.bf16.msra.mxu0 %v2425
        %2499 = vmatprep.subr.bf16.mxu0 0
        %2500 = vmatpush1.bf16.msra.mxu0 %v2426
        %2501 = vmatprep.subr.bf16.mxu0 0
        %2502 = vmatpush1.bf16.msra.mxu0 %v2427
        %2503 = vmatprep.subr.bf16.mxu0 0
        %2504 = vmatpush1.bf16.msra.mxu0 %v2428
        %2505 = vmatprep.subr.bf16.mxu0 0
        %2506 = vmatpush1.bf16.msra.mxu0 %v2429
        %2507 = vmatprep.subr.bf16.mxu0 0
        %2508 = vmatpush1.bf16.msra.mxu0 %v2430
        %2509 = vmatprep.subr.bf16.mxu0 0
        %2510 = vmatpush1.bf16.msra.mxu0 %v2431
        %2511 = vmatprep.subr.bf16.mxu0 0
        %2512 = vmatpush1.bf16.msra.mxu0 %v2432
        %2513 = vmatprep.mubr.bf16.mxu0 %v1541
        %2514 = vmatmul.mubr.bf16.gmra.mrb[0].mxu0 %v1540
        %v2515 = vpop.f32.mrb[0].mxu0
        %v2516 = vadd.f32 %v2287, %v2515
        %v2517 = vpop.f32.mrb[0].mxu0
        %v2518 = vpop.f32.mrb[0].mxu0
        %v2519 = vpop.f32.mrb[0].mxu0
        %2520 = vdwg.mxu0
        %2521 = vmatprep.subr.bf16.mxu0 0
        %2522 = vmatpush1.bf16.msra.mxu0 %v2433
        %2523 = vmatprep.subr.bf16.mxu0 0
        %2524 = vmatpush1.bf16.msra.mxu0 %v2434
        %2525 = vmatprep.subr.bf16.mxu0 0
        %2526 = vmatpush1.bf16.msra.mxu0 %v2435
        %2527 = vmatprep.subr.bf16.mxu0 0
        %2528 = vmatpush1.bf16.msra.mxu0 %v2436
        %2529 = vmatprep.subr.bf16.mxu0 0
        %2530 = vmatpush1.bf16.msra.mxu0 %v2437
        %2531 = vmatprep.subr.bf16.mxu0 0
        %2532 = vmatpush1.bf16.msra.mxu0 %v2438
        %2533 = vmatprep.subr.bf16.mxu0 0
        %2534 = vmatpush1.bf16.msra.mxu0 %v2439
        %2535 = vmatprep.subr.bf16.mxu0 0
        %2536 = vmatpush1.bf16.msra.mxu0 %v2440
        %2537 = vmatprep.subr.bf16.mxu0 0
        %2538 = vmatpush1.bf16.msra.mxu0 %v2441
        %2539 = vmatprep.subr.bf16.mxu0 0
        %2540 = vmatpush1.bf16.msra.mxu0 %v2442
        %2541 = vmatprep.subr.bf16.mxu0 0
        %2542 = vmatpush1.bf16.msra.mxu0 %v2443
        %2543 = vmatprep.subr.bf16.mxu0 0
        %2544 = vmatpush1.bf16.msra.mxu0 %v2444
        %2545 = vmatprep.subr.bf16.mxu0 0
        %2546 = vmatpush1.bf16.msra.mxu0 %v2445
        %2547 = vmatprep.subr.bf16.mxu0 0
        %2548 = vmatpush1.bf16.msra.mxu0 %v2446
        %2549 = vmatprep.subr.bf16.mxu0 0
        %2550 = vmatpush1.bf16.msra.mxu0 %v2447
        %2551 = vmatprep.subr.bf16.mxu0 0
        %2552 = vmatpush1.bf16.msra.mxu0 %v2448
        %2553 = vmatprep.mubr.bf16.mxu0 %v1543
        %2554 = vmatmul.mubr.bf16.gmra.mrb[0].mxu0 %v1542
        %v2555 = vpop.f32.mrb[0].mxu0
        %v2556 = vadd.f32 %v2516, %v2555
        %v2557 = vpop.f32.mrb[0].mxu0
        %v2558 = vpop.f32.mrb[0].mxu0
        %v2559 = vpop.f32.mrb[0].mxu0
        %2560 = vdwg.mxu0
        %v2561 = vrot.slane %v1875, 7
        %v2562 = vmul.f32 %v2561, %v1509
        %v2563 = vadd.f32 %v2556, %v2562
        %v2564 = vrot.slane %v2277, 1
        %v2565 = vmul.f32 %v2564, %v1526
        %v2566 = vadd.f32 %v2563, %v2565
        %v2567 = vmax.f32 %v2566, 0.0
        %2568 = vst [vmem:[%s274] sm:$0xff] %v2567
        %s2569 = sand.u32 %s161, 1
        %s2570 = scalar_lea.sflag [#allocation4], %s2569
        %s2571 = sand.u32 %s161, 1
        %s2572 = smul.addr %s2571, 8
        %s2573 = scalar_lea.vmem [#allocation7], %s2572
        // Predicated region
        $region53: #{tpu_custom_call.1} parent=43 // pred_check
          %p2574 = pneg %p171
        $region54: #{tpu_custom_call.1} parent=43 // pred_check_branch
          %2576 = sbr.rel (%p2574) target = $region56
        $region55: #{tpu_custom_call.1} parent=43 // pred_region
          %s2578 = ssub.s32 128, 128
          %2579 = vsyncadd %s2570, %s2578
          %s2580 = smul.addr %s22, 128
          %s2581 = scalar_lea.hbm %s6, %s2580
          %s2583 = sshll.u32 %s2573, 4
          %s2584 = int_to_ptr.vmem [resolvable:$true] %s2583
          %2586 = dma.vmem_to_hbm [thread:$0]  %s2584, 128, %s2581, %s2570
        $region56: #{tpu_custom_call.1} parent=43 // pred_fallthru
          _
      $region44: #{tpu_custom_call.1} parent=5 // pred_fallthru
        _
      %p2587 = scmp.le.s32.totalorder 2, %s17
      // Predicated region
      $region57: #{tpu_custom_call.1} parent=5 // pred_check
        %p2588 = pneg %p2587
      $region58: #{tpu_custom_call.1} parent=5 // pred_check_branch
        %2590 = sbr.rel (%p2588) target = $region60
      $region59: #{tpu_custom_call.1} parent=5 // pred_region
        %s2591 = ssub.s32 %s17, 2
        // Predicated region
        $region61: #{tpu_custom_call.1} parent=59 // pred_check
          %p2592 = pneg %p177
        $region62: #{tpu_custom_call.1} parent=59 // pred_check_branch
          %2594 = sbr.rel (%p2592) target = $region64
        $region63: #{tpu_custom_call.1} parent=59 // pred_region
          %s2595 = sand.u32 %s162, 1
          %s2596 = scalar_lea.sflag [#allocation4], %s2595
          %s2597 = sand.u32 %s162, 1
          %s2598 = smul.addr %s2597, 8
          %s2599 = scalar_lea.vmem [#allocation7], %s2598
          %2600 = dma.done %s2596, 128
        $region64: #{tpu_custom_call.1} parent=59 // pred_fallthru
          _
      $region60: #{tpu_custom_call.1} parent=5 // pred_fallthru
        _
    $region6: #{tpu_custom_call.1} parent=1 // loop_footer
      %s21 = sadd.s32 1, %s17
    $region7: #{tpu_custom_call.1} parent=1 // loop_footer_branch
      %16 = sbr.rel target = $region3
    $region8: #{tpu_custom_call.1} parent=1 // loop_exit
      _
    %2601 = vsyncpa [#allocation3], 1
    %s2602 = scalar_lea.sflag [#allocation3], 1
    %2603 = vsyncpa %s2602, 1
    %2604 = vsyncpa [#allocation6], 1
    %2605 = vsyncpa [#allocation4], 1
    %s2606 = scalar_lea.sflag [#allocation4], 1
    %2607 = vsyncpa %s2606, 1

</llo_original>
